<compile_context>
chip_gen: v7x
topology: tpu7x:2x2x1
jax: 0.10.0
libtpu: 0.0.40
codegen_flags: <defaults>
</compile_context>

<pallas_src>
import functools

import numpy as np

import jax
import jax.numpy as jnp
from jax import lax
from jax.experimental import pallas as pl
from jax.experimental.pallas import tpu as pltpu


def _round8(n: int) -> int:
    return -(-n // 8) * 8


# ----------------------------------------------------------------------------
# Constant 0/1 gather matrices (trace-time constants, cached by shape).
# Activations are transposed (channels on sublanes, batch*spatial on lanes),
# so gathers are RIGHT-multiplies that pick input columns.
# ----------------------------------------------------------------------------
@functools.lru_cache(maxsize=None)
def _conv_col_gather(batch, hi, wi, k, s):
    """g[kk, (b*hi + s*oh + kh)*wi + s*ow + kw, (b*ho + oh)*wo + ow] = 1."""
    ho, wo = (hi - k) // s + 1, (wi - k) // s + 1
    g = np.zeros((k * k, batch * hi * wi, batch * ho * wo), np.float32)
    for kh in range(k):
        for kw in range(k):
            kk = kh * k + kw
            for b in range(batch):
                for oh in range(ho):
                    for ow in range(wo):
                        col = (b * ho + oh) * wo + ow
                        row = (b * hi + s * oh + kh) * wi + (s * ow + kw)
                        g[kk, row, col] = 1.0
    return jnp.asarray(g, jnp.bfloat16)


@functools.lru_cache(maxsize=None)
def _flatten_col_gather(batch, hw):
    """g[p, b*hw + p, b] = 1 : pulls spatial position p for every batch elem."""
    g = np.zeros((hw, batch * hw, batch), np.float32)
    for p in range(hw):
        for b in range(batch):
            g[p, b * hw + p, b] = 1.0
    return jnp.asarray(g, jnp.bfloat16)


# ----------------------------------------------------------------------------
# Fused kernel: conv1 -> conv2 -> conv3 -> (flatten) fc1 -> fc2
# ----------------------------------------------------------------------------
def _dqn_fused_kernel(p1_ref, w1_ref, g2_ref, w2_ref, g3_ref, w3_ref,
                      gf_ref, wf1_ref, wf2_ref, bias_ref, o_ref,
                      p2_s, p3_s, xf_s):
    f32 = jnp.float32
    cdt = w1_ref.dtype                      # bf16 MXU operand dtype

    def mm(a, b):                           # bf16 x bf16 -> f32 on the MXU
        return jnp.dot(a, b, preferred_element_type=f32)

    # Static bias-segment offsets inside the single packed bias operand.
    F1, F2, F3 = w1_ref.shape[0], w2_ref.shape[0], w3_ref.shape[0]
    Ff, A = wf1_ref.shape[0], wf2_ref.shape[0]
    o1 = 0
    o2 = o1 + _round8(F1)
    o3 = o2 + _round8(F2)
    o4 = o3 + _round8(F3)
    o5 = o4 + _round8(Ff)

    def im2col(h, g_ref, scratch):
        """k^2 gather matmuls staged into a VMEM scratch im2col matrix.

        Tap kk lands in rows [kk*Cin, (kk+1)*Cin) of the scratch -- always an
        8-aligned static sublane slice (Cin in {8, 16, 32}) -- so no in-kernel
        concatenate / reshape / transpose is ever generated."""
        hc = h.astype(cdt)
        cin = hc.shape[0]
        for kk in range(g_ref.shape[0]):
            scratch[kk * cin:(kk + 1) * cin, :] = mm(hc, g_ref[kk])
        return scratch[...].astype(cdt)

    # conv1 (k=2, s=2): patches pre-extracted & transposed by the wrapper.
    h = jnp.maximum(mm(w1_ref[...], p1_ref[...]) + bias_ref[o1:o1 + F1, :], 0.0)
    # conv2 (k=2, s=2): 4 gathers + ONE K=4*F1 weight matmul.
    h = jnp.maximum(mm(w2_ref[...], im2col(h, g2_ref, p2_s))
                    + bias_ref[o2:o2 + F2, :], 0.0)
    # conv3 (k=2, s=1): 4 gathers + ONE K=4*F2 weight matmul.
    h = jnp.maximum(mm(w3_ref[...], im2col(h, g3_ref, p3_s))
                    + bias_ref[o3:o3 + F3, :], 0.0)
    # NCHW flatten (folded into fc1 weight layout) + fc1:
    # H3*W3 tiny gathers + ONE K=F3*H3*W3 weight matmul.
    h = jnp.maximum(mm(wf1_ref[...], im2col(h, gf_ref, xf_s))
                    + bias_ref[o4:o4 + Ff, :], 0.0)
    # fc2 (no ReLU).  Output is (num_actions, batch); wrapper un-transposes.
    o_ref[...] = (mm(wf2_ref[...], h.astype(cdt))
                  + bias_ref[o5:o5 + A, :]).astype(o_ref.dtype)


# ----------------------------------------------------------------------------
# Forward pass (matches DQNCnn.forward)
# ----------------------------------------------------------------------------
def dqn_cnn_forward(params, x):
    B, C, H, W = x.shape
    H1, W1 = (H - 2) // 2 + 1, (W - 2) // 2 + 1
    H2, W2 = (H1 - 2) // 2 + 1, (W1 - 2) // 2 + 1
    H3, W3 = H2 - 1, W2 - 1
    F1 = params["w1"].shape[0]
    F2 = params["w2"].shape[0]
    F3 = params["w3"].shape[0]
    A = params["fc2_w"].shape[0]

    # conv1 im2col (k=2, s=2 non-overlapping == space-to-depth), transposed:
    # rows = (c, kh, kw) patch element, cols = (b, oh, ow) output position.
    xs = x[:, :, :2 * H1, :2 * W1]
    p1 = xs.reshape(B, C, H1, 2, W1, 2).transpose(1, 3, 5, 0, 2, 4)
    p1 = p1.reshape(C * 4, B * H1 * W1).astype(jnp.bfloat16)

    g2 = _conv_col_gather(B, H1, W1, 2, 2)
    g3 = _conv_col_gather(B, H2, W2, 2, 1)
    gf = _flatten_col_gather(B, H3 * W3)

    # grid=() on purpose at this size; for large batches add a "parallel"
    # grid over the batch*spatial lane axis (v7x has 2 TensorCores).
    vmem = pl.BlockSpec(memory_space=pltpu.MemorySpace.VMEM)
    q_t = pl.pallas_call(
        _dqn_fused_kernel,
        out_shape=jax.ShapeDtypeStruct((A, B), jnp.float32),
        in_specs=[vmem] * 10,
        out_specs=vmem,
        scratch_shapes=[
            pltpu.VMEM((4 * F1, B * H2 * W2), jnp.float32),   # conv2 im2col
            pltpu.VMEM((4 * F2, B * H3 * W3), jnp.float32),   # conv3 im2col
            pltpu.VMEM((H3 * W3 * F3, B), jnp.float32),       # fc1 input
        ],
    )(p1, params["w1"], g2, params["w2"], g3, params["w3"],
      gf, params["fc1_w"], params["fc2_w"], params["bias"])
    return q_t.T                                             # (B, num_actions)


# ----------------------------------------------------------------------------
# Parameters: PyTorch-layout f32 (for the reference) + kernel-ready repack
# ----------------------------------------------------------------------------
def init_params(key, input_shape, num_actions, hyper):
    C, H, W = input_shape
    F1, F2, F3 = hyper["filtersize"], hyper["filtersize2"], hyper["filtersize3"]
    H1, W1 = (H - 2) // 2 + 1, (W - 2) // 2 + 1
    H2, W2 = (H1 - 2) // 2 + 1, (W1 - 2) // 2 + 1
    H3, W3 = H2 - 1, W2 - 1
    feat = F3 * H3 * W3

    ks = jax.random.split(key, 10)

    def u(k, shape, fan_in):
        bound = 1.0 / float(np.sqrt(fan_in))
        return jax.random.uniform(k, shape, jnp.float32, -bound, bound)

    raw = {
        "w1": u(ks[0], (F1, C, 2, 2), C * 4),   "b1": u(ks[1], (F1,), C * 4),
        "w2": u(ks[2], (F2, F1, 2, 2), F1 * 4), "b2": u(ks[3], (F2,), F1 * 4),
        "w3": u(ks[4], (F3, F2, 2, 2), F2 * 4), "b3": u(ks[5], (F3,), F2 * 4),
        "fc1_w": u(ks[6], (F3, feat), feat),    "fc1_b": u(ks[7], (F3,), feat),
        "fc2_w": u(ks[8], (num_actions, F3), F3),
        "fc2_b": u(ks[9], (num_actions,), F3),
    }
    return raw, feat


def pack_params(raw):
    """Rearrange PyTorch-layout f32 params into kernel-ready operands."""
    bf16 = jnp.bfloat16
    F1 = raw["w1"].shape[0]
    F2 = raw["w2"].shape[0]
    F3 = raw["w3"].shape[0]
    hw3 = raw["fc1_w"].shape[1] // F3            # H3 * W3

    def pad8(v):
        return jnp.pad(v, (0, _round8(v.shape[0]) - v.shape[0]))

    # All five biases packed into ONE f32 operand (each segment 8-row aligned).
    bias = jnp.concatenate([pad8(raw["b1"]), pad8(raw["b2"]), pad8(raw["b3"]),
                            pad8(raw["fc1_b"]), pad8(raw["fc2_b"])])
    return {
        # conv1: (F1, C*k*k), columns ordered (c, kh, kw) -- matches p1 rows.
        "w1": raw["w1"].reshape(F1, -1).astype(bf16),
        # conv2/conv3: stacked im2col weights (Cout, k*k*Cin), cols = (kk, cin).
        "w2": raw["w2"].transpose(0, 2, 3, 1).reshape(F2, -1).astype(bf16),
        "w3": raw["w3"].transpose(0, 2, 3, 1).reshape(F3, -1).astype(bf16),
        # fc1: PyTorch NCHW flatten order (c, p) re-permuted to (p, c) to match
        # the scratch im2col row order built in-kernel.
        "fc1_w": raw["fc1_w"].reshape(F3, F3, hw3).transpose(0, 2, 1)
                             .reshape(F3, F3 * hw3).astype(bf16),
        # fc2: (num_actions, F3), used as-is in the transposed activation layout.
        "fc2_w": raw["fc2_w"].astype(bf16),
        "bias": bias.reshape(-1, 1).astype(jnp.float32),
    }


# ----------------------------------------------------------------------------
# Pure-JAX f32 reference (mirrors the PyTorch module)
# ----------------------------------------------------------------------------
def dqn_cnn_reference(raw, x):
    def conv_relu(h, w, b, stride):
        y = lax.conv_general_dilated(
            h, w, window_strides=(stride, stride), padding="VALID",
            dimension_numbers=("NCHW", "OIHW", "NCHW"))
        return jax.nn.relu(y + b[None, :, None, None])

    h = conv_relu(x, raw["w1"], raw["b1"], 2)
    h = conv_relu(h, raw["w2"], raw["b2"], 2)
    h = conv_relu(h, raw["w3"], raw["b3"], 1)
    h = h.reshape(h.shape[0], -1)
    h = jax.nn.relu(h @ raw["fc1_w"].T + raw["fc1_b"])
    return h @ raw["fc2_w"].T + raw["fc2_b"]


if __name__ == "__main__":
    key = jax.random.PRNGKey(0)
    k_param, k_x = jax.random.split(key)

    input_shape = (4, 16, 16)        # (C, H, W)
    num_actions = 4
    hyper = {"filtersize": 8, "filtersize2": 16, "filtersize3": 32}
    batch = 2

    raw, feat_size = init_params(k_param, input_shape, num_actions, hyper)
    params = pack_params(raw)
    x = jax.random.normal(k_x, (batch,) + input_shape, jnp.float32)

    fwd = jax.jit(dqn_cnn_forward)
    out = fwd(params, x)
    jax.block_until_ready(out)

    assert out.shape == (batch, num_actions), out.shape
    assert out.dtype == jnp.float32

    # Loose-tolerance f32 reference check (MXU operands are bf16).
    ref = dqn_cnn_reference(raw, x)
    np.testing.assert_allclose(np.asarray(out), np.asarray(ref),
                               rtol=5e-2, atol=1e-2)

    print("KERNEL_OK")
</pallas_src>

<mosaic_0001>
module attributes {stable_mosaic.version = 11 : i64} {
  func.func @_dqn_fused_kernel(%arg0: memref<16x128xbf16, #tpu.memory_space<vmem>>, %arg1: memref<8x16xbf16, #tpu.memory_space<vmem>>, %arg2: memref<4x128x32xbf16, #tpu.memory_space<vmem>>, %arg3: memref<16x32xbf16, #tpu.memory_space<vmem>>, %arg4: memref<4x32x18xbf16, #tpu.memory_space<vmem>>, %arg5: memref<32x64xbf16, #tpu.memory_space<vmem>>, %arg6: memref<9x18x2xbf16, #tpu.memory_space<vmem>>, %arg7: memref<32x288xbf16, #tpu.memory_space<vmem>>, %arg8: memref<4x32xbf16, #tpu.memory_space<vmem>>, %arg9: memref<96x1xf32, #tpu.memory_space<vmem>>, %arg10: memref<4x2xf32, #tpu.memory_space<vmem>>, %arg11: memref<32x32xf32, #tpu.memory_space<vmem>>, %arg12: memref<64x18xf32, #tpu.memory_space<vmem>>, %arg13: memref<288x2xf32, #tpu.memory_space<vmem>>) attributes {dimension_semantics = [], scalar_prefetch = 0 : i64, scratch_operands = 3 : i64, tpu.core_type = #tpu.core_type<tc>} {
    %c0 = arith.constant 0 : index
    %c0_0 = arith.constant 0 : index
    %0 = vector.load %arg1[%c0, %c0_0] : memref<8x16xbf16, #tpu.memory_space<vmem>>, vector<8x16xbf16>
    %c0_1 = arith.constant 0 : index
    %c0_2 = arith.constant 0 : index
    %1 = vector.load %arg0[%c0_1, %c0_2] : memref<16x128xbf16, #tpu.memory_space<vmem>>, vector<16x128xbf16>
    %cst = arith.constant dense<0.000000e+00> : vector<8x128xf32>
    %2 = tpu.matmul %0, %1, %cst {dimension_numbers = #tpu.dot_dimension_numbers<[1], [0], [0], [1], [0, 0, 1, 1], [], []>} : vector<8x16xbf16>, vector<16x128xbf16>, vector<8x128xf32> -> vector<8x128xf32>
    %c0_3 = arith.constant 0 : index
    %c0_4 = arith.constant 0 : index
    %3 = vector.load %arg9[%c0_3, %c0_4] : memref<96x1xf32, #tpu.memory_space<vmem>>, vector<8x1xf32>
    %4 = vector.broadcast %3 : vector<8x1xf32> to vector<8x128xf32>
    %5 = arith.addf %2, %4 : vector<8x128xf32>
    %cst_5 = arith.constant 0.000000e+00 : f32
    %6 = vector.broadcast %cst_5 : f32 to vector<8x128xf32>
    %7 = arith.maximumf %5, %6 : vector<8x128xf32>
    %c0_6 = arith.constant 0 : index
    %c0_7 = arith.constant 0 : index
    %8 = vector.load %arg3[%c0_6, %c0_7] : memref<16x32xbf16, #tpu.memory_space<vmem>>, vector<16x32xbf16>
    %9 = arith.truncf %7 : vector<8x128xf32> to vector<8x128xbf16>
    %c0_8 = arith.constant 0 : index
    %c0_9 = arith.constant 0 : index
    %c0_10 = arith.constant 0 : index
    %10 = vector.load %arg2[%c0_8, %c0_9, %c0_10] : memref<4x128x32xbf16, #tpu.memory_space<vmem>>, vector<1x128x32xbf16>
    %11 = vector.shape_cast %10 : vector<1x128x32xbf16> to vector<128x32xbf16>
    %cst_11 = arith.constant dense<0.000000e+00> : vector<8x32xf32>
    %12 = tpu.matmul %9, %11, %cst_11 {dimension_numbers = #tpu.dot_dimension_numbers<[1], [0], [0], [1], [0, 0, 1, 1], [], []>} : vector<8x128xbf16>, vector<128x32xbf16>, vector<8x32xf32> -> vector<8x32xf32>
    %c0_12 = arith.constant 0 : index
    %c0_13 = arith.constant 0 : index
    %13 = vector.load %arg11[%c0_12, %c0_13] : memref<32x32xf32, #tpu.memory_space<vmem>>, vector<8x32xf32>
    tpu.vector_store %arg11[%c0_12, %c0_13], %12 {strides = array<i32>} : memref<32x32xf32, #tpu.memory_space<vmem>>, vector<8x32xf32>,
    %c1 = arith.constant 1 : index
    %c0_14 = arith.constant 0 : index
    %c0_15 = arith.constant 0 : index
    %14 = vector.load %arg2[%c1, %c0_14, %c0_15] : memref<4x128x32xbf16, #tpu.memory_space<vmem>>, vector<1x128x32xbf16>
    %15 = vector.shape_cast %14 : vector<1x128x32xbf16> to vector<128x32xbf16>
    %cst_16 = arith.constant dense<0.000000e+00> : vector<8x32xf32>
    %16 = tpu.matmul %9, %15, %cst_16 {dimension_numbers = #tpu.dot_dimension_numbers<[1], [0], [0], [1], [0, 0, 1, 1], [], []>} : vector<8x128xbf16>, vector<128x32xbf16>, vector<8x32xf32> -> vector<8x32xf32>
    %c8 = arith.constant 8 : index
    %c0_17 = arith.constant 0 : index
    %17 = vector.load %arg11[%c8, %c0_17] : memref<32x32xf32, #tpu.memory_space<vmem>>, vector<8x32xf32>
    tpu.vector_store %arg11[%c8, %c0_17], %16 {strides = array<i32>} : memref<32x32xf32, #tpu.memory_space<vmem>>, vector<8x32xf32>,
    %c2 = arith.constant 2 : index
    %c0_18 = arith.constant 0 : index
    %c0_19 = arith.constant 0 : index
    %18 = vector.load %arg2[%c2, %c0_18, %c0_19] : memref<4x128x32xbf16, #tpu.memory_space<vmem>>, vector<1x128x32xbf16>
    %19 = vector.shape_cast %18 : vector<1x128x32xbf16> to vector<128x32xbf16>
    %cst_20 = arith.constant dense<0.000000e+00> : vector<8x32xf32>
    %20 = tpu.matmul %9, %19, %cst_20 {dimension_numbers = #tpu.dot_dimension_numbers<[1], [0], [0], [1], [0, 0, 1, 1], [], []>} : vector<8x128xbf16>, vector<128x32xbf16>, vector<8x32xf32> -> vector<8x32xf32>
    %c16 = arith.constant 16 : index
    %c0_21 = arith.constant 0 : index
    %21 = vector.load %arg11[%c16, %c0_21] : memref<32x32xf32, #tpu.memory_space<vmem>>, vector<8x32xf32>
    tpu.vector_store %arg11[%c16, %c0_21], %20 {strides = array<i32>} : memref<32x32xf32, #tpu.memory_space<vmem>>, vector<8x32xf32>,
    %c3 = arith.constant 3 : index
    %c0_22 = arith.constant 0 : index
    %c0_23 = arith.constant 0 : index
    %22 = vector.load %arg2[%c3, %c0_22, %c0_23] : memref<4x128x32xbf16, #tpu.memory_space<vmem>>, vector<1x128x32xbf16>
    %23 = vector.shape_cast %22 : vector<1x128x32xbf16> to vector<128x32xbf16>
    %cst_24 = arith.constant dense<0.000000e+00> : vector<8x32xf32>
    %24 = tpu.matmul %9, %23, %cst_24 {dimension_numbers = #tpu.dot_dimension_numbers<[1], [0], [0], [1], [0, 0, 1, 1], [], []>} : vector<8x128xbf16>, vector<128x32xbf16>, vector<8x32xf32> -> vector<8x32xf32>
    %c24 = arith.constant 24 : index
    %c0_25 = arith.constant 0 : index
    %25 = vector.load %arg11[%c24, %c0_25] : memref<32x32xf32, #tpu.memory_space<vmem>>, vector<8x32xf32>
    tpu.vector_store %arg11[%c24, %c0_25], %24 {strides = array<i32>} : memref<32x32xf32, #tpu.memory_space<vmem>>, vector<8x32xf32>,
    %c0_26 = arith.constant 0 : index
    %c0_27 = arith.constant 0 : index
    %26 = vector.load %arg11[%c0_26, %c0_27] : memref<32x32xf32, #tpu.memory_space<vmem>>, vector<32x32xf32>
    %27 = arith.truncf %26 : vector<32x32xf32> to vector<32x32xbf16>
    %cst_28 = arith.constant dense<0.000000e+00> : vector<16x32xf32>
    %28 = tpu.matmul %8, %27, %cst_28 {dimension_numbers = #tpu.dot_dimension_numbers<[1], [0], [0], [1], [0, 0, 1, 1], [], []>} : vector<16x32xbf16>, vector<32x32xbf16>, vector<16x32xf32> -> vector<16x32xf32>
    %c8_29 = arith.constant 8 : index
    %c0_30 = arith.constant 0 : index
    %29 = vector.load %arg9[%c8_29, %c0_30] : memref<96x1xf32, #tpu.memory_space<vmem>>, vector<16x1xf32>
    %30 = vector.broadcast %29 : vector<16x1xf32> to vector<16x32xf32>
    %31 = arith.addf %28, %30 : vector<16x32xf32>
    %cst_31 = arith.constant 0.000000e+00 : f32
    %32 = vector.broadcast %cst_31 : f32 to vector<16x32xf32>
    %33 = arith.maximumf %31, %32 : vector<16x32xf32>
    %c0_32 = arith.constant 0 : index
    %c0_33 = arith.constant 0 : index
    %34 = vector.load %arg5[%c0_32, %c0_33] : memref<32x64xbf16, #tpu.memory_space<vmem>>, vector<32x64xbf16>
    %35 = arith.truncf %33 : vector<16x32xf32> to vector<16x32xbf16>
    %c0_34 = arith.constant 0 : index
    %c0_35 = arith.constant 0 : index
    %c0_36 = arith.constant 0 : index
    %36 = vector.load %arg4[%c0_34, %c0_35, %c0_36] : memref<4x32x18xbf16, #tpu.memory_space<vmem>>, vector<1x32x18xbf16>
    %37 = vector.shape_cast %36 : vector<1x32x18xbf16> to vector<32x18xbf16>
    %cst_37 = arith.constant dense<0.000000e+00> : vector<16x18xf32>
    %38 = tpu.matmul %35, %37, %cst_37 {dimension_numbers = #tpu.dot_dimension_numbers<[1], [0], [0], [1], [0, 0, 1, 1], [], []>} : vector<16x32xbf16>, vector<32x18xbf16>, vector<16x18xf32> -> vector<16x18xf32>
    %c0_38 = arith.constant 0 : index
    %c0_39 = arith.constant 0 : index
    %39 = vector.load %arg12[%c0_38, %c0_39] : memref<64x18xf32, #tpu.memory_space<vmem>>, vector<16x18xf32>
    tpu.vector_store %arg12[%c0_38, %c0_39], %38 {strides = array<i32>} : memref<64x18xf32, #tpu.memory_space<vmem>>, vector<16x18xf32>,
    %c1_40 = arith.constant 1 : index
    %c0_41 = arith.constant 0 : index
    %c0_42 = arith.constant 0 : index
    %40 = vector.load %arg4[%c1_40, %c0_41, %c0_42] : memref<4x32x18xbf16, #tpu.memory_space<vmem>>, vector<1x32x18xbf16>
    %41 = vector.shape_cast %40 : vector<1x32x18xbf16> to vector<32x18xbf16>
    %cst_43 = arith.constant dense<0.000000e+00> : vector<16x18xf32>
    %42 = tpu.matmul %35, %41, %cst_43 {dimension_numbers = #tpu.dot_dimension_numbers<[1], [0], [0], [1], [0, 0, 1, 1], [], []>} : vector<16x32xbf16>, vector<32x18xbf16>, vector<16x18xf32> -> vector<16x18xf32>
    %c16_44 = arith.constant 16 : index
    %c0_45 = arith.constant 0 : index
    %43 = vector.load %arg12[%c16_44, %c0_45] : memref<64x18xf32, #tpu.memory_space<vmem>>, vector<16x18xf32>
    tpu.vector_store %arg12[%c16_44, %c0_45], %42 {strides = array<i32>} : memref<64x18xf32, #tpu.memory_space<vmem>>, vector<16x18xf32>,
    %c2_46 = arith.constant 2 : index
    %c0_47 = arith.constant 0 : index
    %c0_48 = arith.constant 0 : index
    %44 = vector.load %arg4[%c2_46, %c0_47, %c0_48] : memref<4x32x18xbf16, #tpu.memory_space<vmem>>, vector<1x32x18xbf16>
    %45 = vector.shape_cast %44 : vector<1x32x18xbf16> to vector<32x18xbf16>
    %cst_49 = arith.constant dense<0.000000e+00> : vector<16x18xf32>
    %46 = tpu.matmul %35, %45, %cst_49 {dimension_numbers = #tpu.dot_dimension_numbers<[1], [0], [0], [1], [0, 0, 1, 1], [], []>} : vector<16x32xbf16>, vector<32x18xbf16>, vector<16x18xf32> -> vector<16x18xf32>
    %c32 = arith.constant 32 : index
    %c0_50 = arith.constant 0 : index
    %47 = vector.load %arg12[%c32, %c0_50] : memref<64x18xf32, #tpu.memory_space<vmem>>, vector<16x18xf32>
    tpu.vector_store %arg12[%c32, %c0_50], %46 {strides = array<i32>} : memref<64x18xf32, #tpu.memory_space<vmem>>, vector<16x18xf32>,
    %c3_51 = arith.constant 3 : index
    %c0_52 = arith.constant 0 : index
    %c0_53 = arith.constant 0 : index
    %48 = vector.load %arg4[%c3_51, %c0_52, %c0_53] : memref<4x32x18xbf16, #tpu.memory_space<vmem>>, vector<1x32x18xbf16>
    %49 = vector.shape_cast %48 : vector<1x32x18xbf16> to vector<32x18xbf16>
    %cst_54 = arith.constant dense<0.000000e+00> : vector<16x18xf32>
    %50 = tpu.matmul %35, %49, %cst_54 {dimension_numbers = #tpu.dot_dimension_numbers<[1], [0], [0], [1], [0, 0, 1, 1], [], []>} : vector<16x32xbf16>, vector<32x18xbf16>, vector<16x18xf32> -> vector<16x18xf32>
    %c48 = arith.constant 48 : index
    %c0_55 = arith.constant 0 : index
    %51 = vector.load %arg12[%c48, %c0_55] : memref<64x18xf32, #tpu.memory_space<vmem>>, vector<16x18xf32>
    tpu.vector_store %arg12[%c48, %c0_55], %50 {strides = array<i32>} : memref<64x18xf32, #tpu.memory_space<vmem>>, vector<16x18xf32>,
    %c0_56 = arith.constant 0 : index
    %c0_57 = arith.constant 0 : index
    %52 = vector.load %arg12[%c0_56, %c0_57] : memref<64x18xf32, #tpu.memory_space<vmem>>, vector<64x18xf32>
    %53 = arith.truncf %52 : vector<64x18xf32> to vector<64x18xbf16>
    %cst_58 = arith.constant dense<0.000000e+00> : vector<32x18xf32>
    %54 = tpu.matmul %34, %53, %cst_58 {dimension_numbers = #tpu.dot_dimension_numbers<[1], [0], [0], [1], [0, 0, 1, 1], [], []>} : vector<32x64xbf16>, vector<64x18xbf16>, vector<32x18xf32> -> vector<32x18xf32>
    %c24_59 = arith.constant 24 : index
    %c0_60 = arith.constant 0 : index
    %55 = vector.load %arg9[%c24_59, %c0_60] : memref<96x1xf32, #tpu.memory_space<vmem>>, vector<32x1xf32>
    %56 = vector.broadcast %55 : vector<32x1xf32> to vector<32x18xf32>
    %57 = arith.addf %54, %56 : vector<32x18xf32>
    %cst_61 = arith.constant 0.000000e+00 : f32
    %58 = vector.broadcast %cst_61 : f32 to vector<32x18xf32>
    %59 = arith.maximumf %57, %58 : vector<32x18xf32>
    %c0_62 = arith.constant 0 : index
    %c0_63 = arith.constant 0 : index
    %60 = vector.load %arg7[%c0_62, %c0_63] : memref<32x288xbf16, #tpu.memory_space<vmem>>, vector<32x288xbf16>
    %61 = arith.truncf %59 : vector<32x18xf32> to vector<32x18xbf16>
    %c0_64 = arith.constant 0 : index
    %c0_65 = arith.constant 0 : index
    %c0_66 = arith.constant 0 : index
    %62 = vector.load %arg6[%c0_64, %c0_65, %c0_66] : memref<9x18x2xbf16, #tpu.memory_space<vmem>>, vector<1x18x2xbf16>
    %63 = vector.shape_cast %62 : vector<1x18x2xbf16> to vector<18x2xbf16>
    %cst_67 = arith.constant dense<0.000000e+00> : vector<32x2xf32>
    %64 = tpu.matmul %61, %63, %cst_67 {dimension_numbers = #tpu.dot_dimension_numbers<[1], [0], [0], [1], [0, 0, 1, 1], [], []>} : vector<32x18xbf16>, vector<18x2xbf16>, vector<32x2xf32> -> vector<32x2xf32>
    %c0_68 = arith.constant 0 : index
    %c0_69 = arith.constant 0 : index
    %65 = vector.load %arg13[%c0_68, %c0_69] : memref<288x2xf32, #tpu.memory_space<vmem>>, vector<32x2xf32>
    tpu.vector_store %arg13[%c0_68, %c0_69], %64 {strides = array<i32>} : memref<288x2xf32, #tpu.memory_space<vmem>>, vector<32x2xf32>,
    %c1_70 = arith.constant 1 : index
    %c0_71 = arith.constant 0 : index
    %c0_72 = arith.constant 0 : index
    %66 = vector.load %arg6[%c1_70, %c0_71, %c0_72] : memref<9x18x2xbf16, #tpu.memory_space<vmem>>, vector<1x18x2xbf16>
    %67 = vector.shape_cast %66 : vector<1x18x2xbf16> to vector<18x2xbf16>
    %cst_73 = arith.constant dense<0.000000e+00> : vector<32x2xf32>
    %68 = tpu.matmul %61, %67, %cst_73 {dimension_numbers = #tpu.dot_dimension_numbers<[1], [0], [0], [1], [0, 0, 1, 1], [], []>} : vector<32x18xbf16>, vector<18x2xbf16>, vector<32x2xf32> -> vector<32x2xf32>
    %c32_74 = arith.constant 32 : index
    %c0_75 = arith.constant 0 : index
    %69 = vector.load %arg13[%c32_74, %c0_75] : memref<288x2xf32, #tpu.memory_space<vmem>>, vector<32x2xf32>
    tpu.vector_store %arg13[%c32_74, %c0_75], %68 {strides = array<i32>} : memref<288x2xf32, #tpu.memory_space<vmem>>, vector<32x2xf32>,
    %c2_76 = arith.constant 2 : index
    %c0_77 = arith.constant 0 : index
    %c0_78 = arith.constant 0 : index
    %70 = vector.load %arg6[%c2_76, %c0_77, %c0_78] : memref<9x18x2xbf16, #tpu.memory_space<vmem>>, vector<1x18x2xbf16>
    %71 = vector.shape_cast %70 : vector<1x18x2xbf16> to vector<18x2xbf16>
    %cst_79 = arith.constant dense<0.000000e+00> : vector<32x2xf32>
    %72 = tpu.matmul %61, %71, %cst_79 {dimension_numbers = #tpu.dot_dimension_numbers<[1], [0], [0], [1], [0, 0, 1, 1], [], []>} : vector<32x18xbf16>, vector<18x2xbf16>, vector<32x2xf32> -> vector<32x2xf32>
    %c64 = arith.constant 64 : index
    %c0_80 = arith.constant 0 : index
    %73 = vector.load %arg13[%c64, %c0_80] : memref<288x2xf32, #tpu.memory_space<vmem>>, vector<32x2xf32>
    tpu.vector_store %arg13[%c64, %c0_80], %72 {strides = array<i32>} : memref<288x2xf32, #tpu.memory_space<vmem>>, vector<32x2xf32>,
    %c3_81 = arith.constant 3 : index
    %c0_82 = arith.constant 0 : index
    %c0_83 = arith.constant 0 : index
    %74 = vector.load %arg6[%c3_81, %c0_82, %c0_83] : memref<9x18x2xbf16, #tpu.memory_space<vmem>>, vector<1x18x2xbf16>
    %75 = vector.shape_cast %74 : vector<1x18x2xbf16> to vector<18x2xbf16>
    %cst_84 = arith.constant dense<0.000000e+00> : vector<32x2xf32>
    %76 = tpu.matmul %61, %75, %cst_84 {dimension_numbers = #tpu.dot_dimension_numbers<[1], [0], [0], [1], [0, 0, 1, 1], [], []>} : vector<32x18xbf16>, vector<18x2xbf16>, vector<32x2xf32> -> vector<32x2xf32>
    %c96 = arith.constant 96 : index
    %c0_85 = arith.constant 0 : index
    %77 = vector.load %arg13[%c96, %c0_85] : memref<288x2xf32, #tpu.memory_space<vmem>>, vector<32x2xf32>
    tpu.vector_store %arg13[%c96, %c0_85], %76 {strides = array<i32>} : memref<288x2xf32, #tpu.memory_space<vmem>>, vector<32x2xf32>,
    %c4 = arith.constant 4 : index
    %c0_86 = arith.constant 0 : index
    %c0_87 = arith.constant 0 : index
    %78 = vector.load %arg6[%c4, %c0_86, %c0_87] : memref<9x18x2xbf16, #tpu.memory_space<vmem>>, vector<1x18x2xbf16>
    %79 = vector.shape_cast %78 : vector<1x18x2xbf16> to vector<18x2xbf16>
    %cst_88 = arith.constant dense<0.000000e+00> : vector<32x2xf32>
    %80 = tpu.matmul %61, %79, %cst_88 {dimension_numbers = #tpu.dot_dimension_numbers<[1], [0], [0], [1], [0, 0, 1, 1], [], []>} : vector<32x18xbf16>, vector<18x2xbf16>, vector<32x2xf32> -> vector<32x2xf32>
    %c128 = arith.constant 128 : index
    %c0_89 = arith.constant 0 : index
    %81 = vector.load %arg13[%c128, %c0_89] : memref<288x2xf32, #tpu.memory_space<vmem>>, vector<32x2xf32>
    tpu.vector_store %arg13[%c128, %c0_89], %80 {strides = array<i32>} : memref<288x2xf32, #tpu.memory_space<vmem>>, vector<32x2xf32>,
    %c5 = arith.constant 5 : index
    %c0_90 = arith.constant 0 : index
    %c0_91 = arith.constant 0 : index
    %82 = vector.load %arg6[%c5, %c0_90, %c0_91] : memref<9x18x2xbf16, #tpu.memory_space<vmem>>, vector<1x18x2xbf16>
    %83 = vector.shape_cast %82 : vector<1x18x2xbf16> to vector<18x2xbf16>
    %cst_92 = arith.constant dense<0.000000e+00> : vector<32x2xf32>
    %84 = tpu.matmul %61, %83, %cst_92 {dimension_numbers = #tpu.dot_dimension_numbers<[1], [0], [0], [1], [0, 0, 1, 1], [], []>} : vector<32x18xbf16>, vector<18x2xbf16>, vector<32x2xf32> -> vector<32x2xf32>
    %c160 = arith.constant 160 : index
    %c0_93 = arith.constant 0 : index
    %85 = vector.load %arg13[%c160, %c0_93] : memref<288x2xf32, #tpu.memory_space<vmem>>, vector<32x2xf32>
    tpu.vector_store %arg13[%c160, %c0_93], %84 {strides = array<i32>} : memref<288x2xf32, #tpu.memory_space<vmem>>, vector<32x2xf32>,
    %c6 = arith.constant 6 : index
    %c0_94 = arith.constant 0 : index
    %c0_95 = arith.constant 0 : index
    %86 = vector.load %arg6[%c6, %c0_94, %c0_95] : memref<9x18x2xbf16, #tpu.memory_space<vmem>>, vector<1x18x2xbf16>
    %87 = vector.shape_cast %86 : vector<1x18x2xbf16> to vector<18x2xbf16>
    %cst_96 = arith.constant dense<0.000000e+00> : vector<32x2xf32>
    %88 = tpu.matmul %61, %87, %cst_96 {dimension_numbers = #tpu.dot_dimension_numbers<[1], [0], [0], [1], [0, 0, 1, 1], [], []>} : vector<32x18xbf16>, vector<18x2xbf16>, vector<32x2xf32> -> vector<32x2xf32>
    %c192 = arith.constant 192 : index
    %c0_97 = arith.constant 0 : index
    %89 = vector.load %arg13[%c192, %c0_97] : memref<288x2xf32, #tpu.memory_space<vmem>>, vector<32x2xf32>
    tpu.vector_store %arg13[%c192, %c0_97], %88 {strides = array<i32>} : memref<288x2xf32, #tpu.memory_space<vmem>>, vector<32x2xf32>,
    %c7 = arith.constant 7 : index
    %c0_98 = arith.constant 0 : index
    %c0_99 = arith.constant 0 : index
    %90 = vector.load %arg6[%c7, %c0_98, %c0_99] : memref<9x18x2xbf16, #tpu.memory_space<vmem>>, vector<1x18x2xbf16>
    %91 = vector.shape_cast %90 : vector<1x18x2xbf16> to vector<18x2xbf16>
    %cst_100 = arith.constant dense<0.000000e+00> : vector<32x2xf32>
    %92 = tpu.matmul %61, %91, %cst_100 {dimension_numbers = #tpu.dot_dimension_numbers<[1], [0], [0], [1], [0, 0, 1, 1], [], []>} : vector<32x18xbf16>, vector<18x2xbf16>, vector<32x2xf32> -> vector<32x2xf32>
    %c224 = arith.constant 224 : index
    %c0_101 = arith.constant 0 : index
    %93 = vector.load %arg13[%c224, %c0_101] : memref<288x2xf32, #tpu.memory_space<vmem>>, vector<32x2xf32>
    tpu.vector_store %arg13[%c224, %c0_101], %92 {strides = array<i32>} : memref<288x2xf32, #tpu.memory_space<vmem>>, vector<32x2xf32>,
    %c8_102 = arith.constant 8 : index
    %c0_103 = arith.constant 0 : index
    %c0_104 = arith.constant 0 : index
    %94 = vector.load %arg6[%c8_102, %c0_103, %c0_104] : memref<9x18x2xbf16, #tpu.memory_space<vmem>>, vector<1x18x2xbf16>
    %95 = vector.shape_cast %94 : vector<1x18x2xbf16> to vector<18x2xbf16>
    %cst_105 = arith.constant dense<0.000000e+00> : vector<32x2xf32>
    %96 = tpu.matmul %61, %95, %cst_105 {dimension_numbers = #tpu.dot_dimension_numbers<[1], [0], [0], [1], [0, 0, 1, 1], [], []>} : vector<32x18xbf16>, vector<18x2xbf16>, vector<32x2xf32> -> vector<32x2xf32>
    %c256 = arith.constant 256 : index
    %c0_106 = arith.constant 0 : index
    %97 = vector.load %arg13[%c256, %c0_106] : memref<288x2xf32, #tpu.memory_space<vmem>>, vector<32x2xf32>
    tpu.vector_store %arg13[%c256, %c0_106], %96 {strides = array<i32>} : memref<288x2xf32, #tpu.memory_space<vmem>>, vector<32x2xf32>,
    %c0_107 = arith.constant 0 : index
    %c0_108 = arith.constant 0 : index
    %98 = vector.load %arg13[%c0_107, %c0_108] : memref<288x2xf32, #tpu.memory_space<vmem>>, vector<288x2xf32>
    %99 = arith.truncf %98 : vector<288x2xf32> to vector<288x2xbf16>
    %cst_109 = arith.constant dense<0.000000e+00> : vector<32x2xf32>
    %100 = tpu.matmul %60, %99, %cst_109 {dimension_numbers = #tpu.dot_dimension_numbers<[1], [0], [0], [1], [0, 0, 1, 1], [], []>} : vector<32x288xbf16>, vector<288x2xbf16>, vector<32x2xf32> -> vector<32x2xf32>
    %c56 = arith.constant 56 : index
    %c0_110 = arith.constant 0 : index
    %101 = vector.load %arg9[%c56, %c0_110] : memref<96x1xf32, #tpu.memory_space<vmem>>, vector<32x1xf32>
    %102 = vector.broadcast %101 : vector<32x1xf32> to vector<32x2xf32>
    %103 = arith.addf %100, %102 : vector<32x2xf32>
    %cst_111 = arith.constant 0.000000e+00 : f32
    %104 = vector.broadcast %cst_111 : f32 to vector<32x2xf32>
    %105 = arith.maximumf %103, %104 : vector<32x2xf32>
    %c0_112 = arith.constant 0 : index
    %c0_113 = arith.constant 0 : index
    %106 = vector.load %arg8[%c0_112, %c0_113] : memref<4x32xbf16, #tpu.memory_space<vmem>>, vector<4x32xbf16>
    %107 = arith.truncf %105 : vector<32x2xf32> to vector<32x2xbf16>
    %cst_114 = arith.constant dense<0.000000e+00> : vector<4x2xf32>
    %108 = tpu.matmul %106, %107, %cst_114 {dimension_numbers = #tpu.dot_dimension_numbers<[1], [0], [0], [1], [0, 0, 1, 1], [], []>} : vector<4x32xbf16>, vector<32x2xbf16>, vector<4x2xf32> -> vector<4x2xf32>
    %c88 = arith.constant 88 : index
    %c0_115 = arith.constant 0 : index
    %109 = vector.load %arg9[%c88, %c0_115] : memref<96x1xf32, #tpu.memory_space<vmem>>, vector<4x1xf32>
    %110 = vector.broadcast %109 : vector<4x1xf32> to vector<4x2xf32>
    %111 = arith.addf %108, %110 : vector<4x2xf32>
    %c0_116 = arith.constant 0 : index
    %c0_117 = arith.constant 0 : index
    %112 = vector.load %arg10[%c0_116, %c0_117] : memref<4x2xf32, #tpu.memory_space<vmem>>, vector<4x2xf32>
    tpu.vector_store %arg10[%c0_116, %c0_117], %111 {strides = array<i32>} : memref<4x2xf32, #tpu.memory_space<vmem>>, vector<4x2xf32>,
    return
  }
}

</mosaic_0001>

<llo_original>
// kernel: dqn_cnn_forward.1
$region0: #{dqn_cnn_forward.1}
  #allocation0 [shape = 'u32[]', space=smem, size = 0x4, offset = 0x4, fixed_abs, tag = 'smem constant byte address 0x4 - core index']
  #allocation1 [shape = 'u32[144,128]{1,0:T(1,128)}', space=vmem, size = 0x12000, scoped, tag = 'internal scratch']
  #allocation2 [shape = 'f32[32,32]{1,0:T(8,128)}', space=vmem, size = 0x4000, scoped, tag = 'scratch operand']
  #allocation3 [shape = 'f32[64,18]{1,0:T(8,128)}', space=vmem, size = 0x8000, scoped, tag = 'scratch operand']
  #allocation4 [shape = 'f32[288,2]{1,0:T(8,128)}', space=vmem, size = 0x24000, scoped, tag = 'scratch operand']
  %s0 = inlined_call_operand.vmem [shape: bf16[16,128], index: 0, kind: input, shape index: {}]
  %s1 = inlined_call_operand.vmem [shape: bf16[8,16], index: 1, kind: input, shape index: {}]
  %s2 = inlined_call_operand.vmem [shape: bf16[4,128,32], index: 2, kind: input, shape index: {}]
  %s3 = inlined_call_operand.vmem [shape: bf16[16,32], index: 3, kind: input, shape index: {}]
  %s4 = inlined_call_operand.vmem [shape: bf16[4,32,18], index: 4, kind: input, shape index: {}]
  %s5 = inlined_call_operand.vmem [shape: bf16[32,64], index: 5, kind: input, shape index: {}]
  %s6 = inlined_call_operand.vmem [shape: bf16[9,18,2], index: 6, kind: input, shape index: {}]
  %s7 = inlined_call_operand.vmem [shape: bf16[32,288], index: 7, kind: input, shape index: {}]
  %s8 = inlined_call_operand.vmem [shape: bf16[4,32], index: 8, kind: input, shape index: {}]
  %s9 = inlined_call_operand.vmem [shape: f32[96,1], index: 9, kind: input, shape index: {}]
  %s10 = inlined_call_operand.vmem [shape: f32[4,2], index: 10, kind: output, shape index: {}]
  %s11 = sld [smem:[#allocation0]]
  $region50: #{dqn_cnn_forward.1} parent=0
    _
  %s13 = ssub.s32 1, %s11
  %s14 = scalar_select 0, %s13, %s11
  // Predicated region
  $region2: #{dqn_cnn_forward.1} parent=0 // pred_check
    _
  $region3: #{dqn_cnn_forward.1} parent=0 // pred_check_branch
    %16 = sbr.rel (0) target = $region5
  $region4: #{dqn_cnn_forward.1} parent=0 // pred_region
    _
  $region5: #{dqn_cnn_forward.1} parent=0 // pred_fallthru
    _
  // Predicated region
  $region6: #{dqn_cnn_forward.1} parent=0 // pred_check
    _
  $region7: #{dqn_cnn_forward.1} parent=0 // pred_check_branch
    %18 = sbr.rel (0) target = $region9
  $region8: #{dqn_cnn_forward.1} parent=0 // pred_region
    _
  $region9: #{dqn_cnn_forward.1} parent=0 // pred_fallthru
    _
  // Predicated region
  $region10: #{dqn_cnn_forward.1} parent=0 // pred_check
    _
  $region11: #{dqn_cnn_forward.1} parent=0 // pred_check_branch
    %20 = sbr.rel (0) target = $region13
  $region12: #{dqn_cnn_forward.1} parent=0 // pred_region
    _
  $region13: #{dqn_cnn_forward.1} parent=0 // pred_fallthru
    _
  // Predicated region
  $region14: #{dqn_cnn_forward.1} parent=0 // pred_check
    _
  $region15: #{dqn_cnn_forward.1} parent=0 // pred_check_branch
    %22 = sbr.rel (0) target = $region17
  $region16: #{dqn_cnn_forward.1} parent=0 // pred_region
    _
  $region17: #{dqn_cnn_forward.1} parent=0 // pred_fallthru
    _
  // Predicated region
  $region18: #{dqn_cnn_forward.1} parent=0 // pred_check
    _
  $region19: #{dqn_cnn_forward.1} parent=0 // pred_check_branch
    %24 = sbr.rel (0) target = $region21
  $region20: #{dqn_cnn_forward.1} parent=0 // pred_region
    _
  $region21: #{dqn_cnn_forward.1} parent=0 // pred_fallthru
    _
  // Predicated region
  $region22: #{dqn_cnn_forward.1} parent=0 // pred_check
    _
  $region23: #{dqn_cnn_forward.1} parent=0 // pred_check_branch
    %26 = sbr.rel (0) target = $region25
  $region24: #{dqn_cnn_forward.1} parent=0 // pred_region
    _
  $region25: #{dqn_cnn_forward.1} parent=0 // pred_fallthru
    _
  // Predicated region
  $region26: #{dqn_cnn_forward.1} parent=0 // pred_check
    _
  $region27: #{dqn_cnn_forward.1} parent=0 // pred_check_branch
    %28 = sbr.rel (0) target = $region29
  $region28: #{dqn_cnn_forward.1} parent=0 // pred_region
    _
  $region29: #{dqn_cnn_forward.1} parent=0 // pred_fallthru
    _
  // Predicated region
  $region30: #{dqn_cnn_forward.1} parent=0 // pred_check
    _
  $region31: #{dqn_cnn_forward.1} parent=0 // pred_check_branch
    %30 = sbr.rel (0) target = $region33
  $region32: #{dqn_cnn_forward.1} parent=0 // pred_region
    _
  $region33: #{dqn_cnn_forward.1} parent=0 // pred_fallthru
    _
  // Predicated region
  $region34: #{dqn_cnn_forward.1} parent=0 // pred_check
    _
  $region35: #{dqn_cnn_forward.1} parent=0 // pred_check_branch
    %32 = sbr.rel (0) target = $region37
  $region36: #{dqn_cnn_forward.1} parent=0 // pred_region
    _
  $region37: #{dqn_cnn_forward.1} parent=0 // pred_fallthru
    _
  // Predicated region
  $region38: #{dqn_cnn_forward.1} parent=0 // pred_check
    _
  $region39: #{dqn_cnn_forward.1} parent=0 // pred_check_branch
    %34 = sbr.rel (0) target = $region41
  $region40: #{dqn_cnn_forward.1} parent=0 // pred_region
    _
  $region41: #{dqn_cnn_forward.1} parent=0 // pred_fallthru
    _
  %v36 = vld [vmem:[%s1] sm:$0xf]
  %v37 = vld [vmem:[%s0] sm:$0xf]
  %v38 = vld [vmem:[%s0 + $0x4] sm:$0xf]
  %v39 = vld [vmem:[%s9] sm:$0xff]
  %41 = vset.pattern.permute.xlu0 0
  %42 = vperm.xlu0 %41, %v39
  %v43 = vpop.permute.xlu0 %42
  %v47 = vunpack.c.l.b16 %v37
  %v48 = vunpack.c.l.b16 %v38
  %v49 = vpack.c.b16 %v48, %v47
  %vm51 = vcmask 130048
  %v53 = vsel %vm51, %v36, 0
  %55 = vmatprep.subr.bf16.mxu0 0
  %56 = vmatpush1.bf16.msra.mxu0 %v49
  %57 = vmatprep.subr.bf16.mxu0 0
  %58 = vmatpush1.bf16.msra.mxu0 0
  %59 = vmatprep.subr.bf16.mxu0 0
  %60 = vmatpush1.bf16.msra.mxu0 0
  %61 = vmatprep.subr.bf16.mxu0 0
  %62 = vmatpush1.bf16.msra.mxu0 0
  %63 = vmatprep.subr.bf16.mxu0 0
  %64 = vmatpush1.bf16.msra.mxu0 0
  %65 = vmatprep.subr.bf16.mxu0 0
  %66 = vmatpush1.bf16.msra.mxu0 0
  %67 = vmatprep.subr.bf16.mxu0 0
  %68 = vmatpush1.bf16.msra.mxu0 0
  %69 = vmatprep.subr.bf16.mxu0 0
  %70 = vmatpush1.bf16.msra.mxu0 0
  %71 = vmatprep.subr.bf16.mxu0 0
  %72 = vmatpush1.bf16.msra.mxu0 0
  %73 = vmatprep.subr.bf16.mxu0 0
  %74 = vmatpush1.bf16.msra.mxu0 0
  %75 = vmatprep.subr.bf16.mxu0 0
  %76 = vmatpush1.bf16.msra.mxu0 0
  %77 = vmatprep.subr.bf16.mxu0 0
  %78 = vmatpush1.bf16.msra.mxu0 0
  %79 = vmatprep.subr.bf16.mxu0 0
  %80 = vmatpush1.bf16.msra.mxu0 0
  %81 = vmatprep.subr.bf16.mxu0 0
  %82 = vmatpush1.bf16.msra.mxu0 0
  %83 = vmatprep.subr.bf16.mxu0 0
  %84 = vmatpush1.bf16.msra.mxu0 0
  %85 = vmatprep.subr.bf16.mxu0 0
  %86 = vmatpush1.bf16.msra.mxu0 0
  %87 = vmatprep.mubr.bf16.mxu0 0
  %88 = vmatmul.mubr.bf16.gmra.mrb[0].mxu0 %v53
  %v89 = vpop.f32.mrb[0].mxu0
  %v90 = vadd.f32 %v43, %v89
  %v91 = vpop.f32.mrb[0].mxu0
  %v92 = vpop.f32.mrb[0].mxu0
  %v93 = vpop.f32.mrb[0].mxu0
  %94 = vdwg.mxu0
  %v95 = vmax.f32 %v90, 0.0
  %v96 = vld [vmem:[%s3] sm:$0xf]
  %v97 = vld [vmem:[%s3 + $0x4] sm:$0xf]
  %v98 = vpack.c.bf16 %v95, %v95
  %v99 = vld [vmem:[%s2] sm:$0xf]
  %v100 = vld [vmem:[%s2 + $0x4] sm:$0xf]
  %v101 = vld [vmem:[%s2 + $0x8] sm:$0xf]
  %v102 = vld [vmem:[%s2 + $0xc] sm:$0xf]
  %v103 = vld [vmem:[%s2 + $0x10] sm:$0xf]
  %v104 = vld [vmem:[%s2 + $0x14] sm:$0xf]
  %v105 = vld [vmem:[%s2 + $0x18] sm:$0xf]
  %v106 = vld [vmem:[%s2 + $0x1c] sm:$0xf]
  %v107 = vld [vmem:[%s2 + $0x20] sm:$0xf]
  %v108 = vld [vmem:[%s2 + $0x24] sm:$0xf]
  %v109 = vld [vmem:[%s2 + $0x28] sm:$0xf]
  %v110 = vld [vmem:[%s2 + $0x2c] sm:$0xf]
  %v111 = vld [vmem:[%s2 + $0x30] sm:$0xf]
  %v112 = vld [vmem:[%s2 + $0x34] sm:$0xf]
  %v113 = vld [vmem:[%s2 + $0x38] sm:$0xf]
  %v114 = vld [vmem:[%s2 + $0x3c] sm:$0xf]
  %v131 = vunpack.c.l.b16 %v99
  %v132 = vunpack.c.l.b16 %v100
  %v133 = vunpack.c.l.b16 %v101
  %v134 = vunpack.c.l.b16 %v102
  %v135 = vunpack.c.l.b16 %v103
  %v136 = vunpack.c.l.b16 %v104
  %v137 = vunpack.c.l.b16 %v105
  %v138 = vunpack.c.l.b16 %v106
  %v139 = vunpack.c.l.b16 %v107
  %v140 = vunpack.c.l.b16 %v108
  %v141 = vunpack.c.l.b16 %v109
  %v142 = vunpack.c.l.b16 %v110
  %v143 = vunpack.c.l.b16 %v111
  %v144 = vunpack.c.l.b16 %v112
  %v145 = vunpack.c.l.b16 %v113
  %v146 = vunpack.c.l.b16 %v114
  %v147 = vpack.c.b16 %v132, %v131
  %v148 = vpack.c.b16 %v134, %v133
  %v149 = vpack.c.b16 %v136, %v135
  %v150 = vpack.c.b16 %v138, %v137
  %v151 = vpack.c.b16 %v140, %v139
  %v152 = vpack.c.b16 %v142, %v141
  %v153 = vpack.c.b16 %v144, %v143
  %v154 = vpack.c.b16 %v146, %v145
  %163 = vmatprep.subr.bf16.mxu0 0
  %164 = vmatpush1.bf16.msra.mxu0 %v147
  %165 = vmatprep.subr.bf16.mxu0 0
  %166 = vmatpush1.bf16.msra.mxu0 %v148
  %167 = vmatprep.subr.bf16.mxu0 0
  %168 = vmatpush1.bf16.msra.mxu0 %v149
  %169 = vmatprep.subr.bf16.mxu0 0
  %170 = vmatpush1.bf16.msra.mxu0 %v150
  %171 = vmatprep.subr.bf16.mxu0 0
  %172 = vmatpush1.bf16.msra.mxu0 %v151
  %173 = vmatprep.subr.bf16.mxu0 0
  %174 = vmatpush1.bf16.msra.mxu0 %v152
  %175 = vmatprep.subr.bf16.mxu0 0
  %176 = vmatpush1.bf16.msra.mxu0 %v153
  %177 = vmatprep.subr.bf16.mxu0 0
  %178 = vmatpush1.bf16.msra.mxu0 %v154
  %179 = vmatprep.subr.bf16.mxu0 0
  %180 = vmatpush1.bf16.msra.mxu0 0
  %181 = vmatprep.subr.bf16.mxu0 0
  %182 = vmatpush1.bf16.msra.mxu0 0
  %183 = vmatprep.subr.bf16.mxu0 0
  %184 = vmatpush1.bf16.msra.mxu0 0
  %185 = vmatprep.subr.bf16.mxu0 0
  %186 = vmatpush1.bf16.msra.mxu0 0
  %187 = vmatprep.subr.bf16.mxu0 0
  %188 = vmatpush1.bf16.msra.mxu0 0
  %189 = vmatprep.subr.bf16.mxu0 0
  %190 = vmatpush1.bf16.msra.mxu0 0
  %191 = vmatprep.subr.bf16.mxu0 0
  %192 = vmatpush1.bf16.msra.mxu0 0
  %193 = vmatprep.subr.bf16.mxu0 0
  %194 = vmatpush1.bf16.msra.mxu0 0
  %195 = vmatprep.mubr.bf16.mxu0 0
  %196 = vmatmul.mubr.bf16.gmra.mrb[0].mxu0 %v98
  %v197 = vpop.f32.mrb[0].mxu0
  %v198 = vadd.f32 0.0, %v197
  %v199 = vpop.f32.mrb[0].mxu0
  %v200 = vpop.f32.mrb[0].mxu0
  %v201 = vpop.f32.mrb[0].mxu0
  %202 = vdwg.mxu0
  %vm203 = vcmask 261120
  %204 = vst.msk [vmem:[#allocation2] sm:$0xff] %vm203, %v198
  %s205 = scalar_lea.vmem %s2, 64
  %v206 = vld [vmem:[%s205] sm:$0xf]
  %v207 = vld [vmem:[%s205 + $0x4] sm:$0xf]
  %v208 = vld [vmem:[%s205 + $0x8] sm:$0xf]
  %v209 = vld [vmem:[%s205 + $0xc] sm:$0xf]
  %v210 = vld [vmem:[%s205 + $0x10] sm:$0xf]
  %v211 = vld [vmem:[%s205 + $0x14] sm:$0xf]
  %v212 = vld [vmem:[%s205 + $0x18] sm:$0xf]
  %v213 = vld [vmem:[%s205 + $0x1c] sm:$0xf]
  %v214 = vld [vmem:[%s205 + $0x20] sm:$0xf]
  %v215 = vld [vmem:[%s205 + $0x24] sm:$0xf]
  %v216 = vld [vmem:[%s205 + $0x28] sm:$0xf]
  %v217 = vld [vmem:[%s205 + $0x2c] sm:$0xf]
  %v218 = vld [vmem:[%s205 + $0x30] sm:$0xf]
  %v219 = vld [vmem:[%s205 + $0x34] sm:$0xf]
  %v220 = vld [vmem:[%s205 + $0x38] sm:$0xf]
  %v221 = vld [vmem:[%s205 + $0x3c] sm:$0xf]
  %v238 = vunpack.c.l.b16 %v206
  %v239 = vunpack.c.l.b16 %v207
  %v240 = vunpack.c.l.b16 %v208
  %v241 = vunpack.c.l.b16 %v209
  %v242 = vunpack.c.l.b16 %v210
  %v243 = vunpack.c.l.b16 %v211
  %v244 = vunpack.c.l.b16 %v212
  %v245 = vunpack.c.l.b16 %v213
  %v246 = vunpack.c.l.b16 %v214
  %v247 = vunpack.c.l.b16 %v215
  %v248 = vunpack.c.l.b16 %v216
  %v249 = vunpack.c.l.b16 %v217
  %v250 = vunpack.c.l.b16 %v218
  %v251 = vunpack.c.l.b16 %v219
  %v252 = vunpack.c.l.b16 %v220
  %v253 = vunpack.c.l.b16 %v221
  %v254 = vpack.c.b16 %v239, %v238
  %v255 = vpack.c.b16 %v241, %v240
  %v256 = vpack.c.b16 %v243, %v242
  %v257 = vpack.c.b16 %v245, %v244
  %v258 = vpack.c.b16 %v247, %v246
  %v259 = vpack.c.b16 %v249, %v248
  %v260 = vpack.c.b16 %v251, %v250
  %v261 = vpack.c.b16 %v253, %v252
  %270 = vmatprep.subr.bf16.mxu0 0
  %271 = vmatpush1.bf16.msra.mxu0 %v254
  %272 = vmatprep.subr.bf16.mxu0 0
  %273 = vmatpush1.bf16.msra.mxu0 %v255
  %274 = vmatprep.subr.bf16.mxu0 0
  %275 = vmatpush1.bf16.msra.mxu0 %v256
  %276 = vmatprep.subr.bf16.mxu0 0
  %277 = vmatpush1.bf16.msra.mxu0 %v257
  %278 = vmatprep.subr.bf16.mxu0 0
  %279 = vmatpush1.bf16.msra.mxu0 %v258
  %280 = vmatprep.subr.bf16.mxu0 0
  %281 = vmatpush1.bf16.msra.mxu0 %v259
  %282 = vmatprep.subr.bf16.mxu0 0
  %283 = vmatpush1.bf16.msra.mxu0 %v260
  %284 = vmatprep.subr.bf16.mxu0 0
  %285 = vmatpush1.bf16.msra.mxu0 %v261
  %286 = vmatprep.subr.bf16.mxu0 0
  %287 = vmatpush1.bf16.msra.mxu0 0
  %288 = vmatprep.subr.bf16.mxu0 0
  %289 = vmatpush1.bf16.msra.mxu0 0
  %290 = vmatprep.subr.bf16.mxu0 0
  %291 = vmatpush1.bf16.msra.mxu0 0
  %292 = vmatprep.subr.bf16.mxu0 0
  %293 = vmatpush1.bf16.msra.mxu0 0
  %294 = vmatprep.subr.bf16.mxu0 0
  %295 = vmatpush1.bf16.msra.mxu0 0
  %296 = vmatprep.subr.bf16.mxu0 0
  %297 = vmatpush1.bf16.msra.mxu0 0
  %298 = vmatprep.subr.bf16.mxu0 0
  %299 = vmatpush1.bf16.msra.mxu0 0
  %300 = vmatprep.subr.bf16.mxu0 0
  %301 = vmatpush1.bf16.msra.mxu0 0
  %302 = vmatprep.mubr.bf16.mxu0 0
  %303 = vmatmul.mubr.bf16.gmra.mrb[0].mxu0 %v98
  %v304 = vpop.f32.mrb[0].mxu0
  %v305 = vadd.f32 0.0, %v304
  %v306 = vpop.f32.mrb[0].mxu0
  %v307 = vpop.f32.mrb[0].mxu0
  %v308 = vpop.f32.mrb[0].mxu0
  %309 = vdwg.mxu0
  %310 = vst.msk [vmem:[#allocation2 + $0x8] sm:$0xff] %vm203, %v305
  %s311 = scalar_lea.vmem %s2, 128
  %v312 = vld [vmem:[%s311] sm:$0xf]
  %v313 = vld [vmem:[%s311 + $0x4] sm:$0xf]
  %v314 = vld [vmem:[%s311 + $0x8] sm:$0xf]
  %v315 = vld [vmem:[%s311 + $0xc] sm:$0xf]
  %v316 = vld [vmem:[%s311 + $0x10] sm:$0xf]
  %v317 = vld [vmem:[%s311 + $0x14] sm:$0xf]
  %v318 = vld [vmem:[%s311 + $0x18] sm:$0xf]
  %v319 = vld [vmem:[%s311 + $0x1c] sm:$0xf]
  %v320 = vld [vmem:[%s311 + $0x20] sm:$0xf]
  %v321 = vld [vmem:[%s311 + $0x24] sm:$0xf]
  %v322 = vld [vmem:[%s311 + $0x28] sm:$0xf]
  %v323 = vld [vmem:[%s311 + $0x2c] sm:$0xf]
  %v324 = vld [vmem:[%s311 + $0x30] sm:$0xf]
  %v325 = vld [vmem:[%s311 + $0x34] sm:$0xf]
  %v326 = vld [vmem:[%s311 + $0x38] sm:$0xf]
  %v327 = vld [vmem:[%s311 + $0x3c] sm:$0xf]
  %v344 = vunpack.c.l.b16 %v312
  %v345 = vunpack.c.l.b16 %v313
  %v346 = vunpack.c.l.b16 %v314
  %v347 = vunpack.c.l.b16 %v315
  %v348 = vunpack.c.l.b16 %v316
  %v349 = vunpack.c.l.b16 %v317
  %v350 = vunpack.c.l.b16 %v318
  %v351 = vunpack.c.l.b16 %v319
  %v352 = vunpack.c.l.b16 %v320
  %v353 = vunpack.c.l.b16 %v321
  %v354 = vunpack.c.l.b16 %v322
  %v355 = vunpack.c.l.b16 %v323
  %v356 = vunpack.c.l.b16 %v324
  %v357 = vunpack.c.l.b16 %v325
  %v358 = vunpack.c.l.b16 %v326
  %v359 = vunpack.c.l.b16 %v327
  %v360 = vpack.c.b16 %v345, %v344
  %v361 = vpack.c.b16 %v347, %v346
  %v362 = vpack.c.b16 %v349, %v348
  %v363 = vpack.c.b16 %v351, %v350
  %v364 = vpack.c.b16 %v353, %v352
  %v365 = vpack.c.b16 %v355, %v354
  %v366 = vpack.c.b16 %v357, %v356
  %v367 = vpack.c.b16 %v359, %v358
  %376 = vmatprep.subr.bf16.mxu0 0
  %377 = vmatpush1.bf16.msra.mxu0 %v360
  %378 = vmatprep.subr.bf16.mxu0 0
  %379 = vmatpush1.bf16.msra.mxu0 %v361
  %380 = vmatprep.subr.bf16.mxu0 0
  %381 = vmatpush1.bf16.msra.mxu0 %v362
  %382 = vmatprep.subr.bf16.mxu0 0
  %383 = vmatpush1.bf16.msra.mxu0 %v363
  %384 = vmatprep.subr.bf16.mxu0 0
  %385 = vmatpush1.bf16.msra.mxu0 %v364
  %386 = vmatprep.subr.bf16.mxu0 0
  %387 = vmatpush1.bf16.msra.mxu0 %v365
  %388 = vmatprep.subr.bf16.mxu0 0
  %389 = vmatpush1.bf16.msra.mxu0 %v366
  %390 = vmatprep.subr.bf16.mxu0 0
  %391 = vmatpush1.bf16.msra.mxu0 %v367
  %392 = vmatprep.subr.bf16.mxu0 0
  %393 = vmatpush1.bf16.msra.mxu0 0
  %394 = vmatprep.subr.bf16.mxu0 0
  %395 = vmatpush1.bf16.msra.mxu0 0
  %396 = vmatprep.subr.bf16.mxu0 0
  %397 = vmatpush1.bf16.msra.mxu0 0
  %398 = vmatprep.subr.bf16.mxu0 0
  %399 = vmatpush1.bf16.msra.mxu0 0
  %400 = vmatprep.subr.bf16.mxu0 0
  %401 = vmatpush1.bf16.msra.mxu0 0
  %402 = vmatprep.subr.bf16.mxu0 0
  %403 = vmatpush1.bf16.msra.mxu0 0
  %404 = vmatprep.subr.bf16.mxu0 0
  %405 = vmatpush1.bf16.msra.mxu0 0
  %406 = vmatprep.subr.bf16.mxu0 0
  %407 = vmatpush1.bf16.msra.mxu0 0
  %408 = vmatprep.mubr.bf16.mxu0 0
  %409 = vmatmul.mubr.bf16.gmra.mrb[0].mxu0 %v98
  %v410 = vpop.f32.mrb[0].mxu0
  %v411 = vadd.f32 0.0, %v410
  %v412 = vpop.f32.mrb[0].mxu0
  %v413 = vpop.f32.mrb[0].mxu0
  %v414 = vpop.f32.mrb[0].mxu0
  %415 = vdwg.mxu0
  %416 = vst.msk [vmem:[#allocation2 + $0x10] sm:$0xff] %vm203, %v411
  %s417 = scalar_lea.vmem %s2, 192
  %v418 = vld [vmem:[%s417] sm:$0xf]
  %v419 = vld [vmem:[%s417 + $0x4] sm:$0xf]
  %v420 = vld [vmem:[%s417 + $0x8] sm:$0xf]
  %v421 = vld [vmem:[%s417 + $0xc] sm:$0xf]
  %v422 = vld [vmem:[%s417 + $0x10] sm:$0xf]
  %v423 = vld [vmem:[%s417 + $0x14] sm:$0xf]
  %v424 = vld [vmem:[%s417 + $0x18] sm:$0xf]
  %v425 = vld [vmem:[%s417 + $0x1c] sm:$0xf]
  %v426 = vld [vmem:[%s417 + $0x20] sm:$0xf]
  %v427 = vld [vmem:[%s417 + $0x24] sm:$0xf]
  %v428 = vld [vmem:[%s417 + $0x28] sm:$0xf]
  %v429 = vld [vmem:[%s417 + $0x2c] sm:$0xf]
  %v430 = vld [vmem:[%s417 + $0x30] sm:$0xf]
  %v431 = vld [vmem:[%s417 + $0x34] sm:$0xf]
  %v432 = vld [vmem:[%s417 + $0x38] sm:$0xf]
  %v433 = vld [vmem:[%s417 + $0x3c] sm:$0xf]
  %v450 = vunpack.c.l.b16 %v418
  %v451 = vunpack.c.l.b16 %v419
  %v452 = vunpack.c.l.b16 %v420
  %v453 = vunpack.c.l.b16 %v421
  %v454 = vunpack.c.l.b16 %v422
  %v455 = vunpack.c.l.b16 %v423
  %v456 = vunpack.c.l.b16 %v424
  %v457 = vunpack.c.l.b16 %v425
  %v458 = vunpack.c.l.b16 %v426
  %v459 = vunpack.c.l.b16 %v427
  %v460 = vunpack.c.l.b16 %v428
  %v461 = vunpack.c.l.b16 %v429
  %v462 = vunpack.c.l.b16 %v430
  %v463 = vunpack.c.l.b16 %v431
  %v464 = vunpack.c.l.b16 %v432
  %v465 = vunpack.c.l.b16 %v433
  %v466 = vpack.c.b16 %v451, %v450
  %v467 = vpack.c.b16 %v453, %v452
  %v468 = vpack.c.b16 %v455, %v454
  %v469 = vpack.c.b16 %v457, %v456
  %v470 = vpack.c.b16 %v459, %v458
  %v471 = vpack.c.b16 %v461, %v460
  %v472 = vpack.c.b16 %v463, %v462
  %v473 = vpack.c.b16 %v465, %v464
  %482 = vmatprep.subr.bf16.mxu0 0
  %483 = vmatpush1.bf16.msra.mxu0 %v466
  %484 = vmatprep.subr.bf16.mxu0 0
  %485 = vmatpush1.bf16.msra.mxu0 %v467
  %486 = vmatprep.subr.bf16.mxu0 0
  %487 = vmatpush1.bf16.msra.mxu0 %v468
  %488 = vmatprep.subr.bf16.mxu0 0
  %489 = vmatpush1.bf16.msra.mxu0 %v469
  %490 = vmatprep.subr.bf16.mxu0 0
  %491 = vmatpush1.bf16.msra.mxu0 %v470
  %492 = vmatprep.subr.bf16.mxu0 0
  %493 = vmatpush1.bf16.msra.mxu0 %v471
  %494 = vmatprep.subr.bf16.mxu0 0
  %495 = vmatpush1.bf16.msra.mxu0 %v472
  %496 = vmatprep.subr.bf16.mxu0 0
  %497 = vmatpush1.bf16.msra.mxu0 %v473
  %498 = vmatprep.subr.bf16.mxu0 0
  %499 = vmatpush1.bf16.msra.mxu0 0
  %500 = vmatprep.subr.bf16.mxu0 0
  %501 = vmatpush1.bf16.msra.mxu0 0
  %502 = vmatprep.subr.bf16.mxu0 0
  %503 = vmatpush1.bf16.msra.mxu0 0
  %504 = vmatprep.subr.bf16.mxu0 0
  %505 = vmatpush1.bf16.msra.mxu0 0
  %506 = vmatprep.subr.bf16.mxu0 0
  %507 = vmatpush1.bf16.msra.mxu0 0
  %508 = vmatprep.subr.bf16.mxu0 0
  %509 = vmatpush1.bf16.msra.mxu0 0
  %510 = vmatprep.subr.bf16.mxu0 0
  %511 = vmatpush1.bf16.msra.mxu0 0
  %512 = vmatprep.subr.bf16.mxu0 0
  %513 = vmatpush1.bf16.msra.mxu0 0
  %514 = vmatprep.mubr.bf16.mxu0 0
  %515 = vmatmul.mubr.bf16.gmra.mrb[0].mxu0 %v98
  %v516 = vpop.f32.mrb[0].mxu0
  %v517 = vadd.f32 0.0, %v516
  %v518 = vpop.f32.mrb[0].mxu0
  %v519 = vpop.f32.mrb[0].mxu0
  %v520 = vpop.f32.mrb[0].mxu0
  %521 = vdwg.mxu0
  %522 = vst.msk [vmem:[#allocation2 + $0x18] sm:$0xff] %vm203, %v517
  %v523 = vld [vmem:[#allocation2] sm:$0xff]
  %v524 = vld [vmem:[#allocation2 + $0x8] sm:$0xff]
  %v525 = vld [vmem:[#allocation2 + $0x10] sm:$0xff]
  %v526 = vld [vmem:[#allocation2 + $0x18] sm:$0xff]
  %v527 = vpack.c.bf16 %v524, %v523
  %v528 = vpack.c.bf16 %v526, %v525
  %v529 = vld [vmem:[%s9 + $0x8] sm:$0xff]
  %v530 = vld [vmem:[%s9 + $0x10] sm:$0xff]
  %532 = vset.pattern.permute.xlu0 0
  %533 = vperm.xlu0 %532, %v529
  %v534 = vpop.permute.xlu0 %533
  %537 = vset.pattern.permute.xlu0 0
  %538 = vperm.xlu0 %537, %v530
  %v539 = vpop.permute.xlu0 %538
  %v543 = vunpack.c.l.b16 %v96
  %v544 = vunpack.c.l.b16 %v97
  %v545 = vpack.c.b16 %v544, %v543
  %v547 = vsel %vm203, %v545, 0
  %549 = vmatprep.subr.bf16.mxu0 0
  %550 = vmatpush1.bf16.msra.mxu0 %v527
  %551 = vmatprep.subr.bf16.mxu0 0
  %552 = vmatpush1.bf16.msra.mxu0 %v528
  %553 = vmatprep.subr.bf16.mxu0 0
  %554 = vmatpush1.bf16.msra.mxu0 0
  %555 = vmatprep.subr.bf16.mxu0 0
  %556 = vmatpush1.bf16.msra.mxu0 0
  %557 = vmatprep.subr.bf16.mxu0 0
  %558 = vmatpush1.bf16.msra.mxu0 0
  %559 = vmatprep.subr.bf16.mxu0 0
  %560 = vmatpush1.bf16.msra.mxu0 0
  %561 = vmatprep.subr.bf16.mxu0 0
  %562 = vmatpush1.bf16.msra.mxu0 0
  %563 = vmatprep.subr.bf16.mxu0 0
  %564 = vmatpush1.bf16.msra.mxu0 0
  %565 = vmatprep.subr.bf16.mxu0 0
  %566 = vmatpush1.bf16.msra.mxu0 0
  %567 = vmatprep.subr.bf16.mxu0 0
  %568 = vmatpush1.bf16.msra.mxu0 0
  %569 = vmatprep.subr.bf16.mxu0 0
  %570 = vmatpush1.bf16.msra.mxu0 0
  %571 = vmatprep.subr.bf16.mxu0 0
  %572 = vmatpush1.bf16.msra.mxu0 0
  %573 = vmatprep.subr.bf16.mxu0 0
  %574 = vmatpush1.bf16.msra.mxu0 0
  %575 = vmatprep.subr.bf16.mxu0 0
  %576 = vmatpush1.bf16.msra.mxu0 0
  %577 = vmatprep.subr.bf16.mxu0 0
  %578 = vmatpush1.bf16.msra.mxu0 0
  %579 = vmatprep.subr.bf16.mxu0 0
  %580 = vmatpush1.bf16.msra.mxu0 0
  %581 = vmatprep.mubr.bf16.mxu0 0
  %582 = vmatmul.mubr.bf16.gmra.mrb[0].mxu0 %v547
  %v583 = vpop.f32.mrb[0].mxu0
  %v584 = vadd.f32 %v534, %v583
  %v585 = vpop.f32.mrb[0].mxu0
  %v586 = vpop.f32.mrb[0].mxu0
  %v587 = vadd.f32 %v539, %v586
  %v588 = vpop.f32.mrb[0].mxu0
  %589 = vdwg.mxu0
  %v590 = vmax.f32 %v584, 0.0
  %v591 = vmax.f32 %v587, 0.0
  %v592 = vld [vmem:[%s5] sm:$0xf]
  %v593 = vld [vmem:[%s5 + $0x4] sm:$0xf]
  %v594 = vld [vmem:[%s5 + $0x8] sm:$0xf]
  %v595 = vld [vmem:[%s5 + $0xc] sm:$0xf]
  %v596 = vpack.c.bf16 %v591, %v590
  %v597 = vld [vmem:[%s4] sm:$0xf]
  %v598 = vld [vmem:[%s4 + $0x4] sm:$0xf]
  %v599 = vld [vmem:[%s4 + $0x8] sm:$0xf]
  %v600 = vld [vmem:[%s4 + $0xc] sm:$0xf]
  %v605 = vunpack.c.l.b16 %v597
  %v606 = vunpack.c.l.b16 %v598
  %v607 = vunpack.c.l.b16 %v599
  %v608 = vunpack.c.l.b16 %v600
  %v609 = vpack.c.b16 %v606, %v605
  %v610 = vpack.c.b16 %v608, %v607
  %v614 = vsel %vm203, %v596, 0
  %616 = vmatprep.subr.bf16.mxu0 0
  %617 = vmatpush1.bf16.msra.mxu0 %v609
  %618 = vmatprep.subr.bf16.mxu0 0
  %619 = vmatpush1.bf16.msra.mxu0 %v610
  %620 = vmatprep.subr.bf16.mxu0 0
  %621 = vmatpush1.bf16.msra.mxu0 0
  %622 = vmatprep.subr.bf16.mxu0 0
  %623 = vmatpush1.bf16.msra.mxu0 0
  %624 = vmatprep.subr.bf16.mxu0 0
  %625 = vmatpush1.bf16.msra.mxu0 0
  %626 = vmatprep.subr.bf16.mxu0 0
  %627 = vmatpush1.bf16.msra.mxu0 0
  %628 = vmatprep.subr.bf16.mxu0 0
  %629 = vmatpush1.bf16.msra.mxu0 0
  %630 = vmatprep.subr.bf16.mxu0 0
  %631 = vmatpush1.bf16.msra.mxu0 0
  %632 = vmatprep.subr.bf16.mxu0 0
  %633 = vmatpush1.bf16.msra.mxu0 0
  %634 = vmatprep.subr.bf16.mxu0 0
  %635 = vmatpush1.bf16.msra.mxu0 0
  %636 = vmatprep.subr.bf16.mxu0 0
  %637 = vmatpush1.bf16.msra.mxu0 0
  %638 = vmatprep.subr.bf16.mxu0 0
  %639 = vmatpush1.bf16.msra.mxu0 0
  %640 = vmatprep.subr.bf16.mxu0 0
  %641 = vmatpush1.bf16.msra.mxu0 0
  %642 = vmatprep.subr.bf16.mxu0 0
  %643 = vmatpush1.bf16.msra.mxu0 0
  %644 = vmatprep.subr.bf16.mxu0 0
  %645 = vmatpush1.bf16.msra.mxu0 0
  %646 = vmatprep.subr.bf16.mxu0 0
  %647 = vmatpush1.bf16.msra.mxu0 0
  %648 = vmatprep.mubr.bf16.mxu0 0
  %649 = vmatmul.mubr.bf16.gmra.mrb[0].mxu0 %v614
  %v650 = vpop.f32.mrb[0].mxu0
  %v651 = vadd.f32 0.0, %v650
  %v652 = vpop.f32.mrb[0].mxu0
  %v653 = vpop.f32.mrb[0].mxu0
  %v654 = vadd.f32 0.0, %v653
  %v655 = vpop.f32.mrb[0].mxu0
  %656 = vdwg.mxu0
  %vm657 = vcmask 146432
  %658 = vst.msk [vmem:[#allocation3] sm:$0xff] %vm657, %v651
  %659 = vst.msk [vmem:[#allocation3 + $0x8] sm:$0xff] %vm657, %v654
  %s660 = scalar_lea.vmem %s4, 16
  %v661 = vld [vmem:[%s660] sm:$0xf]
  %v662 = vld [vmem:[%s660 + $0x4] sm:$0xf]
  %v663 = vld [vmem:[%s660 + $0x8] sm:$0xf]
  %v664 = vld [vmem:[%s660 + $0xc] sm:$0xf]
  %v669 = vunpack.c.l.b16 %v661
  %v670 = vunpack.c.l.b16 %v662
  %v671 = vunpack.c.l.b16 %v663
  %v672 = vunpack.c.l.b16 %v664
  %v673 = vpack.c.b16 %v670, %v669
  %v674 = vpack.c.b16 %v672, %v671
  %677 = vmatprep.subr.bf16.mxu0 0
  %678 = vmatpush1.bf16.msra.mxu0 %v673
  %679 = vmatprep.subr.bf16.mxu0 0
  %680 = vmatpush1.bf16.msra.mxu0 %v674
  %681 = vmatprep.subr.bf16.mxu0 0
  %682 = vmatpush1.bf16.msra.mxu0 0
  %683 = vmatprep.subr.bf16.mxu0 0
  %684 = vmatpush1.bf16.msra.mxu0 0
  %685 = vmatprep.subr.bf16.mxu0 0
  %686 = vmatpush1.bf16.msra.mxu0 0
  %687 = vmatprep.subr.bf16.mxu0 0
  %688 = vmatpush1.bf16.msra.mxu0 0
  %689 = vmatprep.subr.bf16.mxu0 0
  %690 = vmatpush1.bf16.msra.mxu0 0
  %691 = vmatprep.subr.bf16.mxu0 0
  %692 = vmatpush1.bf16.msra.mxu0 0
  %693 = vmatprep.subr.bf16.mxu0 0
  %694 = vmatpush1.bf16.msra.mxu0 0
  %695 = vmatprep.subr.bf16.mxu0 0
  %696 = vmatpush1.bf16.msra.mxu0 0
  %697 = vmatprep.subr.bf16.mxu0 0
  %698 = vmatpush1.bf16.msra.mxu0 0
  %699 = vmatprep.subr.bf16.mxu0 0
  %700 = vmatpush1.bf16.msra.mxu0 0
  %701 = vmatprep.subr.bf16.mxu0 0
  %702 = vmatpush1.bf16.msra.mxu0 0
  %703 = vmatprep.subr.bf16.mxu0 0
  %704 = vmatpush1.bf16.msra.mxu0 0
  %705 = vmatprep.subr.bf16.mxu0 0
  %706 = vmatpush1.bf16.msra.mxu0 0
  %707 = vmatprep.subr.bf16.mxu0 0
  %708 = vmatpush1.bf16.msra.mxu0 0
  %709 = vmatprep.mubr.bf16.mxu0 0
  %710 = vmatmul.mubr.bf16.gmra.mrb[0].mxu0 %v614
  %v711 = vpop.f32.mrb[0].mxu0
  %v712 = vadd.f32 0.0, %v711
  %v713 = vpop.f32.mrb[0].mxu0
  %v714 = vpop.f32.mrb[0].mxu0
  %v715 = vadd.f32 0.0, %v714
  %v716 = vpop.f32.mrb[0].mxu0
  %717 = vdwg.mxu0
  %718 = vst.msk [vmem:[#allocation3 + $0x10] sm:$0xff] %vm657, %v712
  %719 = vst.msk [vmem:[#allocation3 + $0x18] sm:$0xff] %vm657, %v715
  %s720 = scalar_lea.vmem %s4, 32
  %v721 = vld [vmem:[%s720] sm:$0xf]
  %v722 = vld [vmem:[%s720 + $0x4] sm:$0xf]
  %v723 = vld [vmem:[%s720 + $0x8] sm:$0xf]
  %v724 = vld [vmem:[%s720 + $0xc] sm:$0xf]
  %v729 = vunpack.c.l.b16 %v721
  %v730 = vunpack.c.l.b16 %v722
  %v731 = vunpack.c.l.b16 %v723
  %v732 = vunpack.c.l.b16 %v724
  %v733 = vpack.c.b16 %v730, %v729
  %v734 = vpack.c.b16 %v732, %v731
  %737 = vmatprep.subr.bf16.mxu0 0
  %738 = vmatpush1.bf16.msra.mxu0 %v733
  %739 = vmatprep.subr.bf16.mxu0 0
  %740 = vmatpush1.bf16.msra.mxu0 %v734
  %741 = vmatprep.subr.bf16.mxu0 0
  %742 = vmatpush1.bf16.msra.mxu0 0
  %743 = vmatprep.subr.bf16.mxu0 0
  %744 = vmatpush1.bf16.msra.mxu0 0
  %745 = vmatprep.subr.bf16.mxu0 0
  %746 = vmatpush1.bf16.msra.mxu0 0
  %747 = vmatprep.subr.bf16.mxu0 0
  %748 = vmatpush1.bf16.msra.mxu0 0
  %749 = vmatprep.subr.bf16.mxu0 0
  %750 = vmatpush1.bf16.msra.mxu0 0
  %751 = vmatprep.subr.bf16.mxu0 0
  %752 = vmatpush1.bf16.msra.mxu0 0
  %753 = vmatprep.subr.bf16.mxu0 0
  %754 = vmatpush1.bf16.msra.mxu0 0
  %755 = vmatprep.subr.bf16.mxu0 0
  %756 = vmatpush1.bf16.msra.mxu0 0
  %757 = vmatprep.subr.bf16.mxu0 0
  %758 = vmatpush1.bf16.msra.mxu0 0
  %759 = vmatprep.subr.bf16.mxu0 0
  %760 = vmatpush1.bf16.msra.mxu0 0
  %761 = vmatprep.subr.bf16.mxu0 0
  %762 = vmatpush1.bf16.msra.mxu0 0
  %763 = vmatprep.subr.bf16.mxu0 0
  %764 = vmatpush1.bf16.msra.mxu0 0
  %765 = vmatprep.subr.bf16.mxu0 0
  %766 = vmatpush1.bf16.msra.mxu0 0
  %767 = vmatprep.subr.bf16.mxu0 0
  %768 = vmatpush1.bf16.msra.mxu0 0
  %769 = vmatprep.mubr.bf16.mxu0 0
  %770 = vmatmul.mubr.bf16.gmra.mrb[0].mxu0 %v614
  %v771 = vpop.f32.mrb[0].mxu0
  %v772 = vadd.f32 0.0, %v771
  %v773 = vpop.f32.mrb[0].mxu0
  %v774 = vpop.f32.mrb[0].mxu0
  %v775 = vadd.f32 0.0, %v774
  %v776 = vpop.f32.mrb[0].mxu0
  %777 = vdwg.mxu0
  %778 = vst.msk [vmem:[#allocation3 + $0x20] sm:$0xff] %vm657, %v772
  %779 = vst.msk [vmem:[#allocation3 + $0x28] sm:$0xff] %vm657, %v775
  %s780 = scalar_lea.vmem %s4, 48
  %v781 = vld [vmem:[%s780] sm:$0xf]
  %v782 = vld [vmem:[%s780 + $0x4] sm:$0xf]
  %v783 = vld [vmem:[%s780 + $0x8] sm:$0xf]
  %v784 = vld [vmem:[%s780 + $0xc] sm:$0xf]
  %v789 = vunpack.c.l.b16 %v781
  %v790 = vunpack.c.l.b16 %v782
  %v791 = vunpack.c.l.b16 %v783
  %v792 = vunpack.c.l.b16 %v784
  %v793 = vpack.c.b16 %v790, %v789
  %v794 = vpack.c.b16 %v792, %v791
  %797 = vmatprep.subr.bf16.mxu0 0
  %798 = vmatpush1.bf16.msra.mxu0 %v793
  %799 = vmatprep.subr.bf16.mxu0 0
  %800 = vmatpush1.bf16.msra.mxu0 %v794
  %801 = vmatprep.subr.bf16.mxu0 0
  %802 = vmatpush1.bf16.msra.mxu0 0
  %803 = vmatprep.subr.bf16.mxu0 0
  %804 = vmatpush1.bf16.msra.mxu0 0
  %805 = vmatprep.subr.bf16.mxu0 0
  %806 = vmatpush1.bf16.msra.mxu0 0
  %807 = vmatprep.subr.bf16.mxu0 0
  %808 = vmatpush1.bf16.msra.mxu0 0
  %809 = vmatprep.subr.bf16.mxu0 0
  %810 = vmatpush1.bf16.msra.mxu0 0
  %811 = vmatprep.subr.bf16.mxu0 0
  %812 = vmatpush1.bf16.msra.mxu0 0
  %813 = vmatprep.subr.bf16.mxu0 0
  %814 = vmatpush1.bf16.msra.mxu0 0
  %815 = vmatprep.subr.bf16.mxu0 0
  %816 = vmatpush1.bf16.msra.mxu0 0
  %817 = vmatprep.subr.bf16.mxu0 0
  %818 = vmatpush1.bf16.msra.mxu0 0
  %819 = vmatprep.subr.bf16.mxu0 0
  %820 = vmatpush1.bf16.msra.mxu0 0
  %821 = vmatprep.subr.bf16.mxu0 0
  %822 = vmatpush1.bf16.msra.mxu0 0
  %823 = vmatprep.subr.bf16.mxu0 0
  %824 = vmatpush1.bf16.msra.mxu0 0
  %825 = vmatprep.subr.bf16.mxu0 0
  %826 = vmatpush1.bf16.msra.mxu0 0
  %827 = vmatprep.subr.bf16.mxu0 0
  %828 = vmatpush1.bf16.msra.mxu0 0
  %829 = vmatprep.mubr.bf16.mxu0 0
  %830 = vmatmul.mubr.bf16.gmra.mrb[0].mxu0 %v614
  %v831 = vpop.f32.mrb[0].mxu0
  %v832 = vadd.f32 0.0, %v831
  %v833 = vpop.f32.mrb[0].mxu0
  %v834 = vpop.f32.mrb[0].mxu0
  %v835 = vadd.f32 0.0, %v834
  %v836 = vpop.f32.mrb[0].mxu0
  %837 = vdwg.mxu0
  %838 = vst.msk [vmem:[#allocation3 + $0x30] sm:$0xff] %vm657, %v832
  %839 = vst.msk [vmem:[#allocation3 + $0x38] sm:$0xff] %vm657, %v835
  %v840 = vld [vmem:[#allocation3] sm:$0xff]
  %v841 = vld [vmem:[#allocation3 + $0x8] sm:$0xff]
  %v842 = vld [vmem:[#allocation3 + $0x10] sm:$0xff]
  %v843 = vld [vmem:[#allocation3 + $0x18] sm:$0xff]
  %v844 = vld [vmem:[#allocation3 + $0x20] sm:$0xff]
  %v845 = vld [vmem:[#allocation3 + $0x28] sm:$0xff]
  %v846 = vld [vmem:[#allocation3 + $0x30] sm:$0xff]
  %v847 = vld [vmem:[#allocation3 + $0x38] sm:$0xff]
  %v848 = vpack.c.bf16 %v841, %v840
  %v849 = vpack.c.bf16 %v843, %v842
  %v850 = vpack.c.bf16 %v845, %v844
  %v851 = vpack.c.bf16 %v847, %v846
  %v852 = vld [vmem:[%s9 + $0x18] sm:$0xff]
  %v853 = vld [vmem:[%s9 + $0x20] sm:$0xff]
  %v854 = vld [vmem:[%s9 + $0x28] sm:$0xff]
  %v855 = vld [vmem:[%s9 + $0x30] sm:$0xff]
  %857 = vset.pattern.permute.xlu0 0
  %858 = vperm.xlu0 %857, %v852
  %v859 = vpop.permute.xlu0 %858
  %862 = vset.pattern.permute.xlu0 0
  %863 = vperm.xlu0 %862, %v853
  %v864 = vpop.permute.xlu0 %863
  %867 = vset.pattern.permute.xlu0 0
  %868 = vperm.xlu0 %867, %v854
  %v869 = vpop.permute.xlu0 %868
  %872 = vset.pattern.permute.xlu0 0
  %873 = vperm.xlu0 %872, %v855
  %v874 = vpop.permute.xlu0 %873
  %v880 = vunpack.c.l.b16 %v592
  %v881 = vunpack.c.l.b16 %v593
  %v882 = vunpack.c.l.b16 %v594
  %v883 = vunpack.c.l.b16 %v595
  %v884 = vpack.c.b16 %v881, %v880
  %v885 = vpack.c.b16 %v883, %v882
  %vm886 = vcmask 523264
  %v888 = vsel %vm886, %v884, 0
  %v891 = vsel %vm886, %v885, 0
  %893 = vmatprep.subr.bf16.mxu0 0
  %894 = vmatpush1.bf16.msra.mxu0 %v848
  %895 = vmatprep.subr.bf16.mxu0 0
  %896 = vmatpush1.bf16.msra.mxu0 %v849
  %897 = vmatprep.subr.bf16.mxu0 0
  %898 = vmatpush1.bf16.msra.mxu0 %v850
  %899 = vmatprep.subr.bf16.mxu0 0
  %900 = vmatpush1.bf16.msra.mxu0 %v851
  %901 = vmatprep.subr.bf16.mxu0 0
  %902 = vmatpush1.bf16.msra.mxu0 0
  %903 = vmatprep.subr.bf16.mxu0 0
  %904 = vmatpush1.bf16.msra.mxu0 0
  %905 = vmatprep.subr.bf16.mxu0 0
  %906 = vmatpush1.bf16.msra.mxu0 0
  %907 = vmatprep.subr.bf16.mxu0 0
  %908 = vmatpush1.bf16.msra.mxu0 0
  %909 = vmatprep.subr.bf16.mxu0 0
  %910 = vmatpush1.bf16.msra.mxu0 0
  %911 = vmatprep.subr.bf16.mxu0 0
  %912 = vmatpush1.bf16.msra.mxu0 0
  %913 = vmatprep.subr.bf16.mxu0 0
  %914 = vmatpush1.bf16.msra.mxu0 0
  %915 = vmatprep.subr.bf16.mxu0 0
  %916 = vmatpush1.bf16.msra.mxu0 0
  %917 = vmatprep.subr.bf16.mxu0 0
  %918 = vmatpush1.bf16.msra.mxu0 0
  %919 = vmatprep.subr.bf16.mxu0 0
  %920 = vmatpush1.bf16.msra.mxu0 0
  %921 = vmatprep.subr.bf16.mxu0 0
  %922 = vmatpush1.bf16.msra.mxu0 0
  %923 = vmatprep.subr.bf16.mxu0 0
  %924 = vmatpush1.bf16.msra.mxu0 0
  %925 = vmatprep.mubr.bf16.mxu0 0
  %926 = vmatmul.mubr.bf16.gmra.mrb[0].mxu0 %v888
  %v927 = vpop.f32.mrb[0].mxu0
  %v928 = vadd.f32 %v859, %v927
  %v929 = vpop.f32.mrb[0].mxu0
  %v930 = vpop.f32.mrb[0].mxu0
  %v931 = vadd.f32 %v864, %v930
  %v932 = vpop.f32.mrb[0].mxu0
  %933 = vmatprep.mubr.bf16.mxu0 0
  %934 = vmatmul.mubr.bf16.gmra.mrb[0].mxu0 %v891
  %v935 = vpop.f32.mrb[0].mxu0
  %v936 = vadd.f32 %v869, %v935
  %v937 = vpop.f32.mrb[0].mxu0
  %v938 = vpop.f32.mrb[0].mxu0
  %v939 = vadd.f32 %v874, %v938
  %v940 = vpop.f32.mrb[0].mxu0
  %941 = vdwg.mxu0
  %v942 = vmax.f32 %v928, 0.0
  %v943 = vmax.f32 %v931, 0.0
  %v944 = vmax.f32 %v936, 0.0
  %v945 = vmax.f32 %v939, 0.0
  %v946 = vld [vmem:[%s7] sm:$0xff]
  %v947 = vld [vmem:[%s7 + $0x8] sm:$0xf]
  %v948 = vld [vmem:[%s7 + $0xc] sm:$0xff]
  %v949 = vld [vmem:[%s7 + $0x14] sm:$0xf]
  %v950 = vld [vmem:[%s7 + $0x18] sm:$0xff]
  %v951 = vld [vmem:[%s7 + $0x20] sm:$0xf]
  %v952 = vld [vmem:[%s7 + $0x24] sm:$0xff]
  %v953 = vld [vmem:[%s7 + $0x2c] sm:$0xf]
  %v954 = vpack.c.bf16 %v943, %v942
  %v955 = vpack.c.bf16 %v945, %v944
  %v956 = vld [vmem:[%s6] sm:$0xf]
  %v957 = vld [vmem:[%s6 + $0x4] sm:$0xf]
  %v958 = vld [vmem:[%s6 + $0x8] sm:$0x1]
  %v962 = vunpack.c.l.b16 %v956
  %v963 = vunpack.c.l.b16 %v957
  %v964 = vunpack.c.l.b16 %v958
  %v965 = vpack.c.b16 %v963, %v962
  %v966 = vpack.c.b16 %v964, %v964
  %v969 = vsel %vm657, %v954, 0
  %v972 = vsel %vm657, %v955, 0
  %vm974 = vcmask 1040384
  %v976 = vsel %vm974, %v966, 0
  %978 = vmatprep.subr.bf16.mxu0 0
  %979 = vmatpush1.bf16.msra.mxu0 %v965
  %980 = vmatprep.subr.bf16.mxu0 0
  %981 = vmatpush1.bf16.msra.mxu0 %v976
  %982 = vmatprep.subr.bf16.mxu0 0
  %983 = vmatpush1.bf16.msra.mxu0 0
  %984 = vmatprep.subr.bf16.mxu0 0
  %985 = vmatpush1.bf16.msra.mxu0 0
  %986 = vmatprep.subr.bf16.mxu0 0
  %987 = vmatpush1.bf16.msra.mxu0 0
  %988 = vmatprep.subr.bf16.mxu0 0
  %989 = vmatpush1.bf16.msra.mxu0 0
  %990 = vmatprep.subr.bf16.mxu0 0
  %991 = vmatpush1.bf16.msra.mxu0 0
  %992 = vmatprep.subr.bf16.mxu0 0
  %993 = vmatpush1.bf16.msra.mxu0 0
  %994 = vmatprep.subr.bf16.mxu0 0
  %995 = vmatpush1.bf16.msra.mxu0 0
  %996 = vmatprep.subr.bf16.mxu0 0
  %997 = vmatpush1.bf16.msra.mxu0 0
  %998 = vmatprep.subr.bf16.mxu0 0
  %999 = vmatpush1.bf16.msra.mxu0 0
  %1000 = vmatprep.subr.bf16.mxu0 0
  %1001 = vmatpush1.bf16.msra.mxu0 0
  %1002 = vmatprep.subr.bf16.mxu0 0
  %1003 = vmatpush1.bf16.msra.mxu0 0
  %1004 = vmatprep.subr.bf16.mxu0 0
  %1005 = vmatpush1.bf16.msra.mxu0 0
  %1006 = vmatprep.subr.bf16.mxu0 0
  %1007 = vmatpush1.bf16.msra.mxu0 0
  %1008 = vmatprep.subr.bf16.mxu0 0
  %1009 = vmatpush1.bf16.msra.mxu0 0
  %1010 = vmatprep.mubr.bf16.mxu0 0
  %1011 = vmatmul.mubr.bf16.gmra.mrb[0].mxu0 %v969
  %v1012 = vpop.f32.mrb[0].mxu0
  %v1013 = vadd.f32 0.0, %v1012
  %v1014 = vpop.f32.mrb[0].mxu0
  %v1015 = vpop.f32.mrb[0].mxu0
  %v1016 = vadd.f32 0.0, %v1015
  %v1017 = vpop.f32.mrb[0].mxu0
  %1018 = vmatprep.mubr.bf16.mxu0 0
  %1019 = vmatmul.mubr.bf16.gmra.mrb[0].mxu0 %v972
  %v1020 = vpop.f32.mrb[0].mxu0
  %v1021 = vadd.f32 0.0, %v1020
  %v1022 = vpop.f32.mrb[0].mxu0
  %v1023 = vpop.f32.mrb[0].mxu0
  %v1024 = vadd.f32 0.0, %v1023
  %v1025 = vpop.f32.mrb[0].mxu0
  %1026 = vdwg.mxu0
  %vm1027 = vcmask 15360
  %1028 = vst.msk [vmem:[#allocation4] sm:$0xff] %vm1027, %v1013
  %1029 = vst.msk [vmem:[#allocation4 + $0x8] sm:$0xff] %vm1027, %v1016
  %1030 = vst.msk [vmem:[#allocation4 + $0x10] sm:$0xff] %vm1027, %v1021
  %1031 = vst.msk [vmem:[#allocation4 + $0x18] sm:$0xff] %vm1027, %v1024
  %s1032 = scalar_lea.vmem %s6, 12
  %v1033 = vld [vmem:[%s1032] sm:$0xf]
  %v1034 = vld [vmem:[%s1032 + $0x4] sm:$0xf]
  %v1035 = vld [vmem:[%s1032 + $0x8] sm:$0x1]
  %v1039 = vunpack.c.l.b16 %v1033
  %v1040 = vunpack.c.l.b16 %v1034
  %v1041 = vunpack.c.l.b16 %v1035
  %v1042 = vpack.c.b16 %v1040, %v1039
  %v1043 = vpack.c.b16 %v1041, %v1041
  %v1046 = vsel %vm974, %v1043, 0
  %1048 = vmatprep.subr.bf16.mxu0 0
  %1049 = vmatpush1.bf16.msra.mxu0 %v1042
  %1050 = vmatprep.subr.bf16.mxu0 0
  %1051 = vmatpush1.bf16.msra.mxu0 %v1046
  %1052 = vmatprep.subr.bf16.mxu0 0
  %1053 = vmatpush1.bf16.msra.mxu0 0
  %1054 = vmatprep.subr.bf16.mxu0 0
  %1055 = vmatpush1.bf16.msra.mxu0 0
  %1056 = vmatprep.subr.bf16.mxu0 0
  %1057 = vmatpush1.bf16.msra.mxu0 0
  %1058 = vmatprep.subr.bf16.mxu0 0
  %1059 = vmatpush1.bf16.msra.mxu0 0
  %1060 = vmatprep.subr.bf16.mxu0 0
  %1061 = vmatpush1.bf16.msra.mxu0 0
  %1062 = vmatprep.subr.bf16.mxu0 0
  %1063 = vmatpush1.bf16.msra.mxu0 0
  %1064 = vmatprep.subr.bf16.mxu0 0
  %1065 = vmatpush1.bf16.msra.mxu0 0
  %1066 = vmatprep.subr.bf16.mxu0 0
  %1067 = vmatpush1.bf16.msra.mxu0 0
  %1068 = vmatprep.subr.bf16.mxu0 0
  %1069 = vmatpush1.bf16.msra.mxu0 0
  %1070 = vmatprep.subr.bf16.mxu0 0
  %1071 = vmatpush1.bf16.msra.mxu0 0
  %1072 = vmatprep.subr.bf16.mxu0 0
  %1073 = vmatpush1.bf16.msra.mxu0 0
  %1074 = vmatprep.subr.bf16.mxu0 0
  %1075 = vmatpush1.bf16.msra.mxu0 0
  %1076 = vmatprep.subr.bf16.mxu0 0
  %1077 = vmatpush1.bf16.msra.mxu0 0
  %1078 = vmatprep.subr.bf16.mxu0 0
  %1079 = vmatpush1.bf16.msra.mxu0 0
  %1080 = vmatprep.mubr.bf16.mxu0 0
  %1081 = vmatmul.mubr.bf16.gmra.mrb[0].mxu0 %v969
  %v1082 = vpop.f32.mrb[0].mxu0
  %v1083 = vadd.f32 0.0, %v1082
  %v1084 = vpop.f32.mrb[0].mxu0
  %v1085 = vpop.f32.mrb[0].mxu0
  %v1086 = vadd.f32 0.0, %v1085
  %v1087 = vpop.f32.mrb[0].mxu0
  %1088 = vmatprep.mubr.bf16.mxu0 0
  %1089 = vmatmul.mubr.bf16.gmra.mrb[0].mxu0 %v972
  %v1090 = vpop.f32.mrb[0].mxu0
  %v1091 = vadd.f32 0.0, %v1090
  %v1092 = vpop.f32.mrb[0].mxu0
  %v1093 = vpop.f32.mrb[0].mxu0
  %v1094 = vadd.f32 0.0, %v1093
  %v1095 = vpop.f32.mrb[0].mxu0
  %1096 = vdwg.mxu0
  %1097 = vst.msk [vmem:[#allocation4 + $0x20] sm:$0xff] %vm1027, %v1083
  %1098 = vst.msk [vmem:[#allocation4 + $0x28] sm:$0xff] %vm1027, %v1086
  %1099 = vst.msk [vmem:[#allocation4 + $0x30] sm:$0xff] %vm1027, %v1091
  %1100 = vst.msk [vmem:[#allocation4 + $0x38] sm:$0xff] %vm1027, %v1094
  %s1101 = scalar_lea.vmem %s6, 24
  %v1102 = vld [vmem:[%s1101] sm:$0xf]
  %v1103 = vld [vmem:[%s1101 + $0x4] sm:$0xf]
  %v1104 = vld [vmem:[%s1101 + $0x8] sm:$0x1]
  %v1108 = vunpack.c.l.b16 %v1102
  %v1109 = vunpack.c.l.b16 %v1103
  %v1110 = vunpack.c.l.b16 %v1104
  %v1111 = vpack.c.b16 %v1109, %v1108
  %v1112 = vpack.c.b16 %v1110, %v1110
  %v1115 = vsel %vm974, %v1112, 0
  %1117 = vmatprep.subr.bf16.mxu0 0
  %1118 = vmatpush1.bf16.msra.mxu0 %v1111
  %1119 = vmatprep.subr.bf16.mxu0 0
  %1120 = vmatpush1.bf16.msra.mxu0 %v1115
  %1121 = vmatprep.subr.bf16.mxu0 0
  %1122 = vmatpush1.bf16.msra.mxu0 0
  %1123 = vmatprep.subr.bf16.mxu0 0
  %1124 = vmatpush1.bf16.msra.mxu0 0
  %1125 = vmatprep.subr.bf16.mxu0 0
  %1126 = vmatpush1.bf16.msra.mxu0 0
  %1127 = vmatprep.subr.bf16.mxu0 0
  %1128 = vmatpush1.bf16.msra.mxu0 0
  %1129 = vmatprep.subr.bf16.mxu0 0
  %1130 = vmatpush1.bf16.msra.mxu0 0
  %1131 = vmatprep.subr.bf16.mxu0 0
  %1132 = vmatpush1.bf16.msra.mxu0 0
  %1133 = vmatprep.subr.bf16.mxu0 0
  %1134 = vmatpush1.bf16.msra.mxu0 0
  %1135 = vmatprep.subr.bf16.mxu0 0
  %1136 = vmatpush1.bf16.msra.mxu0 0
  %1137 = vmatprep.subr.bf16.mxu0 0
  %1138 = vmatpush1.bf16.msra.mxu0 0
  %1139 = vmatprep.subr.bf16.mxu0 0
  %1140 = vmatpush1.bf16.msra.mxu0 0
  %1141 = vmatprep.subr.bf16.mxu0 0
  %1142 = vmatpush1.bf16.msra.mxu0 0
  %1143 = vmatprep.subr.bf16.mxu0 0
  %1144 = vmatpush1.bf16.msra.mxu0 0
  %1145 = vmatprep.subr.bf16.mxu0 0
  %1146 = vmatpush1.bf16.msra.mxu0 0
  %1147 = vmatprep.subr.bf16.mxu0 0
  %1148 = vmatpush1.bf16.msra.mxu0 0
  %1149 = vmatprep.mubr.bf16.mxu0 0
  %1150 = vmatmul.mubr.bf16.gmra.mrb[0].mxu0 %v969
  %v1151 = vpop.f32.mrb[0].mxu0
  %v1152 = vadd.f32 0.0, %v1151
  %v1153 = vpop.f32.mrb[0].mxu0
  %v1154 = vpop.f32.mrb[0].mxu0
  %v1155 = vadd.f32 0.0, %v1154
  %v1156 = vpop.f32.mrb[0].mxu0
  %1157 = vmatprep.mubr.bf16.mxu0 0
  %1158 = vmatmul.mubr.bf16.gmra.mrb[0].mxu0 %v972
  %v1159 = vpop.f32.mrb[0].mxu0
  %v1160 = vadd.f32 0.0, %v1159
  %v1161 = vpop.f32.mrb[0].mxu0
  %v1162 = vpop.f32.mrb[0].mxu0
  %v1163 = vadd.f32 0.0, %v1162
  %v1164 = vpop.f32.mrb[0].mxu0
  %1165 = vdwg.mxu0
  %1166 = vst.msk [vmem:[#allocation4 + $0x40] sm:$0xff] %vm1027, %v1152
  %1167 = vst.msk [vmem:[#allocation4 + $0x48] sm:$0xff] %vm1027, %v1155
  %1168 = vst.msk [vmem:[#allocation4 + $0x50] sm:$0xff] %vm1027, %v1160
  %1169 = vst.msk [vmem:[#allocation4 + $0x58] sm:$0xff] %vm1027, %v1163
  %s1170 = scalar_lea.vmem %s6, 36
  %v1171 = vld [vmem:[%s1170] sm:$0xf]
  %v1172 = vld [vmem:[%s1170 + $0x4] sm:$0xf]
  %v1173 = vld [vmem:[%s1170 + $0x8] sm:$0x1]
  %v1177 = vunpack.c.l.b16 %v1171
  %v1178 = vunpack.c.l.b16 %v1172
  %v1179 = vunpack.c.l.b16 %v1173
  %v1180 = vpack.c.b16 %v1178, %v1177
  %v1181 = vpack.c.b16 %v1179, %v1179
  %v1184 = vsel %vm974, %v1181, 0
  %1186 = vmatprep.subr.bf16.mxu0 0
  %1187 = vmatpush1.bf16.msra.mxu0 %v1180
  %1188 = vmatprep.subr.bf16.mxu0 0
  %1189 = vmatpush1.bf16.msra.mxu0 %v1184
  %1190 = vmatprep.subr.bf16.mxu0 0
  %1191 = vmatpush1.bf16.msra.mxu0 0
  %1192 = vmatprep.subr.bf16.mxu0 0
  %1193 = vmatpush1.bf16.msra.mxu0 0
  %1194 = vmatprep.subr.bf16.mxu0 0
  %1195 = vmatpush1.bf16.msra.mxu0 0
  %1196 = vmatprep.subr.bf16.mxu0 0
  %1197 = vmatpush1.bf16.msra.mxu0 0
  %1198 = vmatprep.subr.bf16.mxu0 0
  %1199 = vmatpush1.bf16.msra.mxu0 0
  %1200 = vmatprep.subr.bf16.mxu0 0
  %1201 = vmatpush1.bf16.msra.mxu0 0
  %1202 = vmatprep.subr.bf16.mxu0 0
  %1203 = vmatpush1.bf16.msra.mxu0 0
  %1204 = vmatprep.subr.bf16.mxu0 0
  %1205 = vmatpush1.bf16.msra.mxu0 0
  %1206 = vmatprep.subr.bf16.mxu0 0
  %1207 = vmatpush1.bf16.msra.mxu0 0
  %1208 = vmatprep.subr.bf16.mxu0 0
  %1209 = vmatpush1.bf16.msra.mxu0 0
  %1210 = vmatprep.subr.bf16.mxu0 0
  %1211 = vmatpush1.bf16.msra.mxu0 0
  %1212 = vmatprep.subr.bf16.mxu0 0
  %1213 = vmatpush1.bf16.msra.mxu0 0
  %1214 = vmatprep.subr.bf16.mxu0 0
  %1215 = vmatpush1.bf16.msra.mxu0 0
  %1216 = vmatprep.subr.bf16.mxu0 0
  %1217 = vmatpush1.bf16.msra.mxu0 0
  %1218 = vmatprep.mubr.bf16.mxu0 0
  %1219 = vmatmul.mubr.bf16.gmra.mrb[0].mxu0 %v969
  %v1220 = vpop.f32.mrb[0].mxu0
  %v1221 = vadd.f32 0.0, %v1220
  %v1222 = vpop.f32.mrb[0].mxu0
  %v1223 = vpop.f32.mrb[0].mxu0
  %v1224 = vadd.f32 0.0, %v1223
  %v1225 = vpop.f32.mrb[0].mxu0
  %1226 = vmatprep.mubr.bf16.mxu0 0
  %1227 = vmatmul.mubr.bf16.gmra.mrb[0].mxu0 %v972
  %v1228 = vpop.f32.mrb[0].mxu0
  %v1229 = vadd.f32 0.0, %v1228
  %v1230 = vpop.f32.mrb[0].mxu0
  %v1231 = vpop.f32.mrb[0].mxu0
  %v1232 = vadd.f32 0.0, %v1231
  %v1233 = vpop.f32.mrb[0].mxu0
  %1234 = vdwg.mxu0
  %1235 = vst.msk [vmem:[#allocation4 + $0x60] sm:$0xff] %vm1027, %v1221
  %1236 = vst.msk [vmem:[#allocation4 + $0x68] sm:$0xff] %vm1027, %v1224
  %1237 = vst.msk [vmem:[#allocation4 + $0x70] sm:$0xff] %vm1027, %v1229
  %1238 = vst.msk [vmem:[#allocation4 + $0x78] sm:$0xff] %vm1027, %v1232
  %s1239 = scalar_lea.vmem %s6, 48
  %v1240 = vld [vmem:[%s1239] sm:$0xf]
  %v1241 = vld [vmem:[%s1239 + $0x4] sm:$0xf]
  %v1242 = vld [vmem:[%s1239 + $0x8] sm:$0x1]
  %v1246 = vunpack.c.l.b16 %v1240
  %v1247 = vunpack.c.l.b16 %v1241
  %v1248 = vunpack.c.l.b16 %v1242
  %v1249 = vpack.c.b16 %v1247, %v1246
  %v1250 = vpack.c.b16 %v1248, %v1248
  %v1253 = vsel %vm974, %v1250, 0
  %1255 = vmatprep.subr.bf16.mxu0 0
  %1256 = vmatpush1.bf16.msra.mxu0 %v1249
  %1257 = vmatprep.subr.bf16.mxu0 0
  %1258 = vmatpush1.bf16.msra.mxu0 %v1253
  %1259 = vmatprep.subr.bf16.mxu0 0
  %1260 = vmatpush1.bf16.msra.mxu0 0
  %1261 = vmatprep.subr.bf16.mxu0 0
  %1262 = vmatpush1.bf16.msra.mxu0 0
  %1263 = vmatprep.subr.bf16.mxu0 0
  %1264 = vmatpush1.bf16.msra.mxu0 0
  %1265 = vmatprep.subr.bf16.mxu0 0
  %1266 = vmatpush1.bf16.msra.mxu0 0
  %1267 = vmatprep.subr.bf16.mxu0 0
  %1268 = vmatpush1.bf16.msra.mxu0 0
  %1269 = vmatprep.subr.bf16.mxu0 0
  %1270 = vmatpush1.bf16.msra.mxu0 0
  %1271 = vmatprep.subr.bf16.mxu0 0
  %1272 = vmatpush1.bf16.msra.mxu0 0
  %1273 = vmatprep.subr.bf16.mxu0 0
  %1274 = vmatpush1.bf16.msra.mxu0 0
  %1275 = vmatprep.subr.bf16.mxu0 0
  %1276 = vmatpush1.bf16.msra.mxu0 0
  %1277 = vmatprep.subr.bf16.mxu0 0
  %1278 = vmatpush1.bf16.msra.mxu0 0
  %1279 = vmatprep.subr.bf16.mxu0 0
  %1280 = vmatpush1.bf16.msra.mxu0 0
  %1281 = vmatprep.subr.bf16.mxu0 0
  %1282 = vmatpush1.bf16.msra.mxu0 0
  %1283 = vmatprep.subr.bf16.mxu0 0
  %1284 = vmatpush1.bf16.msra.mxu0 0
  %1285 = vmatprep.subr.bf16.mxu0 0
  %1286 = vmatpush1.bf16.msra.mxu0 0
  %1287 = vmatprep.mubr.bf16.mxu0 0
  %1288 = vmatmul.mubr.bf16.gmra.mrb[0].mxu0 %v969
  %v1289 = vpop.f32.mrb[0].mxu0
  %v1290 = vadd.f32 0.0, %v1289
  %v1291 = vpop.f32.mrb[0].mxu0
  %v1292 = vpop.f32.mrb[0].mxu0
  %v1293 = vadd.f32 0.0, %v1292
  %v1294 = vpop.f32.mrb[0].mxu0
  %1295 = vmatprep.mubr.bf16.mxu0 0
  %1296 = vmatmul.mubr.bf16.gmra.mrb[0].mxu0 %v972
  %v1297 = vpop.f32.mrb[0].mxu0
  %v1298 = vadd.f32 0.0, %v1297
  %v1299 = vpop.f32.mrb[0].mxu0
  %v1300 = vpop.f32.mrb[0].mxu0
  %v1301 = vadd.f32 0.0, %v1300
  %v1302 = vpop.f32.mrb[0].mxu0
  %1303 = vdwg.mxu0
  %1304 = vst.msk [vmem:[#allocation4 + $0x80] sm:$0xff] %vm1027, %v1290
  %1305 = vst.msk [vmem:[#allocation4 + $0x88] sm:$0xff] %vm1027, %v1293
  %1306 = vst.msk [vmem:[#allocation4 + $0x90] sm:$0xff] %vm1027, %v1298
  %1307 = vst.msk [vmem:[#allocation4 + $0x98] sm:$0xff] %vm1027, %v1301
  %s1308 = scalar_lea.vmem %s6, 60
  %v1309 = vld [vmem:[%s1308] sm:$0xf]
  %v1310 = vld [vmem:[%s1308 + $0x4] sm:$0xf]
  %v1311 = vld [vmem:[%s1308 + $0x8] sm:$0x1]
  %v1315 = vunpack.c.l.b16 %v1309
  %v1316 = vunpack.c.l.b16 %v1310
  %v1317 = vunpack.c.l.b16 %v1311
  %v1318 = vpack.c.b16 %v1316, %v1315
  %v1319 = vpack.c.b16 %v1317, %v1317
  %v1322 = vsel %vm974, %v1319, 0
  %1324 = vmatprep.subr.bf16.mxu0 0
  %1325 = vmatpush1.bf16.msra.mxu0 %v1318
  %1326 = vmatprep.subr.bf16.mxu0 0
  %1327 = vmatpush1.bf16.msra.mxu0 %v1322
  %1328 = vmatprep.subr.bf16.mxu0 0
  %1329 = vmatpush1.bf16.msra.mxu0 0
  %1330 = vmatprep.subr.bf16.mxu0 0
  %1331 = vmatpush1.bf16.msra.mxu0 0
  %1332 = vmatprep.subr.bf16.mxu0 0
  %1333 = vmatpush1.bf16.msra.mxu0 0
  %1334 = vmatprep.subr.bf16.mxu0 0
  %1335 = vmatpush1.bf16.msra.mxu0 0
  %1336 = vmatprep.subr.bf16.mxu0 0
  %1337 = vmatpush1.bf16.msra.mxu0 0
  %1338 = vmatprep.subr.bf16.mxu0 0
  %1339 = vmatpush1.bf16.msra.mxu0 0
  %1340 = vmatprep.subr.bf16.mxu0 0
  %1341 = vmatpush1.bf16.msra.mxu0 0
  %1342 = vmatprep.subr.bf16.mxu0 0
  %1343 = vmatpush1.bf16.msra.mxu0 0
  %1344 = vmatprep.subr.bf16.mxu0 0
  %1345 = vmatpush1.bf16.msra.mxu0 0
  %1346 = vmatprep.subr.bf16.mxu0 0
  %1347 = vmatpush1.bf16.msra.mxu0 0
  %1348 = vmatprep.subr.bf16.mxu0 0
  %1349 = vmatpush1.bf16.msra.mxu0 0
  %1350 = vmatprep.subr.bf16.mxu0 0
  %1351 = vmatpush1.bf16.msra.mxu0 0
  %1352 = vmatprep.subr.bf16.mxu0 0
  %1353 = vmatpush1.bf16.msra.mxu0 0
  %1354 = vmatprep.subr.bf16.mxu0 0
  %1355 = vmatpush1.bf16.msra.mxu0 0
  %1356 = vmatprep.mubr.bf16.mxu0 0
  %1357 = vmatmul.mubr.bf16.gmra.mrb[0].mxu0 %v969
  %v1358 = vpop.f32.mrb[0].mxu0
  %v1359 = vadd.f32 0.0, %v1358
  %v1360 = vpop.f32.mrb[0].mxu0
  %v1361 = vpop.f32.mrb[0].mxu0
  %v1362 = vadd.f32 0.0, %v1361
  %v1363 = vpop.f32.mrb[0].mxu0
  %1364 = vmatprep.mubr.bf16.mxu0 0
  %1365 = vmatmul.mubr.bf16.gmra.mrb[0].mxu0 %v972
  %v1366 = vpop.f32.mrb[0].mxu0
  %v1367 = vadd.f32 0.0, %v1366
  %v1368 = vpop.f32.mrb[0].mxu0
  %v1369 = vpop.f32.mrb[0].mxu0
  %v1370 = vadd.f32 0.0, %v1369
  %v1371 = vpop.f32.mrb[0].mxu0
  %1372 = vdwg.mxu0
  %1373 = vst.msk [vmem:[#allocation4 + $0xa0] sm:$0xff] %vm1027, %v1359
  %1374 = vst.msk [vmem:[#allocation4 + $0xa8] sm:$0xff] %vm1027, %v1362
  %1375 = vst.msk [vmem:[#allocation4 + $0xb0] sm:$0xff] %vm1027, %v1367
  %1376 = vst.msk [vmem:[#allocation4 + $0xb8] sm:$0xff] %vm1027, %v1370
  %s1377 = scalar_lea.vmem %s6, 72
  %v1378 = vld [vmem:[%s1377] sm:$0xf]
  %v1379 = vld [vmem:[%s1377 + $0x4] sm:$0xf]
  %v1380 = vld [vmem:[%s1377 + $0x8] sm:$0x1]
  %v1384 = vunpack.c.l.b16 %v1378
  %v1385 = vunpack.c.l.b16 %v1379
  %v1386 = vunpack.c.l.b16 %v1380
  %v1387 = vpack.c.b16 %v1385, %v1384
  %v1388 = vpack.c.b16 %v1386, %v1386
  %v1391 = vsel %vm974, %v1388, 0
  %1393 = vmatprep.subr.bf16.mxu0 0
  %1394 = vmatpush1.bf16.msra.mxu0 %v1387
  %1395 = vmatprep.subr.bf16.mxu0 0
  %1396 = vmatpush1.bf16.msra.mxu0 %v1391
  %1397 = vmatprep.subr.bf16.mxu0 0
  %1398 = vmatpush1.bf16.msra.mxu0 0
  %1399 = vmatprep.subr.bf16.mxu0 0
  %1400 = vmatpush1.bf16.msra.mxu0 0
  %1401 = vmatprep.subr.bf16.mxu0 0
  %1402 = vmatpush1.bf16.msra.mxu0 0
  %1403 = vmatprep.subr.bf16.mxu0 0
  %1404 = vmatpush1.bf16.msra.mxu0 0
  %1405 = vmatprep.subr.bf16.mxu0 0
  %1406 = vmatpush1.bf16.msra.mxu0 0
  %1407 = vmatprep.subr.bf16.mxu0 0
  %1408 = vmatpush1.bf16.msra.mxu0 0
  %1409 = vmatprep.subr.bf16.mxu0 0
  %1410 = vmatpush1.bf16.msra.mxu0 0
  %1411 = vmatprep.subr.bf16.mxu0 0
  %1412 = vmatpush1.bf16.msra.mxu0 0
  %1413 = vmatprep.subr.bf16.mxu0 0
  %1414 = vmatpush1.bf16.msra.mxu0 0
  %1415 = vmatprep.subr.bf16.mxu0 0
  %1416 = vmatpush1.bf16.msra.mxu0 0
  %1417 = vmatprep.subr.bf16.mxu0 0
  %1418 = vmatpush1.bf16.msra.mxu0 0
  %1419 = vmatprep.subr.bf16.mxu0 0
  %1420 = vmatpush1.bf16.msra.mxu0 0
  %1421 = vmatprep.subr.bf16.mxu0 0
  %1422 = vmatpush1.bf16.msra.mxu0 0
  %1423 = vmatprep.subr.bf16.mxu0 0
  %1424 = vmatpush1.bf16.msra.mxu0 0
  %1425 = vmatprep.mubr.bf16.mxu0 0
  %1426 = vmatmul.mubr.bf16.gmra.mrb[0].mxu0 %v969
  %v1427 = vpop.f32.mrb[0].mxu0
  %v1428 = vadd.f32 0.0, %v1427
  %v1429 = vpop.f32.mrb[0].mxu0
  %v1430 = vpop.f32.mrb[0].mxu0
  %v1431 = vadd.f32 0.0, %v1430
  %v1432 = vpop.f32.mrb[0].mxu0
  %1433 = vmatprep.mubr.bf16.mxu0 0
  %1434 = vmatmul.mubr.bf16.gmra.mrb[0].mxu0 %v972
  %v1435 = vpop.f32.mrb[0].mxu0
  %v1436 = vadd.f32 0.0, %v1435
  %v1437 = vpop.f32.mrb[0].mxu0
  %v1438 = vpop.f32.mrb[0].mxu0
  %v1439 = vadd.f32 0.0, %v1438
  %v1440 = vpop.f32.mrb[0].mxu0
  %1441 = vdwg.mxu0
  %1442 = vst.msk [vmem:[#allocation4 + $0xc0] sm:$0xff] %vm1027, %v1428
  %1443 = vst.msk [vmem:[#allocation4 + $0xc8] sm:$0xff] %vm1027, %v1431
  %1444 = vst.msk [vmem:[#allocation4 + $0xd0] sm:$0xff] %vm1027, %v1436
  %1445 = vst.msk [vmem:[#allocation4 + $0xd8] sm:$0xff] %vm1027, %v1439
  %s1446 = scalar_lea.vmem %s6, 84
  %v1447 = vld [vmem:[%s1446] sm:$0xf]
  %v1448 = vld [vmem:[%s1446 + $0x4] sm:$0xf]
  %v1449 = vld [vmem:[%s1446 + $0x8] sm:$0x1]
  %v1453 = vunpack.c.l.b16 %v1447
  %v1454 = vunpack.c.l.b16 %v1448
  %v1455 = vunpack.c.l.b16 %v1449
  %v1456 = vpack.c.b16 %v1454, %v1453
  %v1457 = vpack.c.b16 %v1455, %v1455
  %v1460 = vsel %vm974, %v1457, 0
  %1462 = vmatprep.subr.bf16.mxu0 0
  %1463 = vmatpush1.bf16.msra.mxu0 %v1456
  %1464 = vmatprep.subr.bf16.mxu0 0
  %1465 = vmatpush1.bf16.msra.mxu0 %v1460
  %1466 = vmatprep.subr.bf16.mxu0 0
  %1467 = vmatpush1.bf16.msra.mxu0 0
  %1468 = vmatprep.subr.bf16.mxu0 0
  %1469 = vmatpush1.bf16.msra.mxu0 0
  %1470 = vmatprep.subr.bf16.mxu0 0
  %1471 = vmatpush1.bf16.msra.mxu0 0
  %1472 = vmatprep.subr.bf16.mxu0 0
  %1473 = vmatpush1.bf16.msra.mxu0 0
  %1474 = vmatprep.subr.bf16.mxu0 0
  %1475 = vmatpush1.bf16.msra.mxu0 0
  %1476 = vmatprep.subr.bf16.mxu0 0
  %1477 = vmatpush1.bf16.msra.mxu0 0
  %1478 = vmatprep.subr.bf16.mxu0 0
  %1479 = vmatpush1.bf16.msra.mxu0 0
  %1480 = vmatprep.subr.bf16.mxu0 0
  %1481 = vmatpush1.bf16.msra.mxu0 0
  %1482 = vmatprep.subr.bf16.mxu0 0
  %1483 = vmatpush1.bf16.msra.mxu0 0
  %1484 = vmatprep.subr.bf16.mxu0 0
  %1485 = vmatpush1.bf16.msra.mxu0 0
  %1486 = vmatprep.subr.bf16.mxu0 0
  %1487 = vmatpush1.bf16.msra.mxu0 0
  %1488 = vmatprep.subr.bf16.mxu0 0
  %1489 = vmatpush1.bf16.msra.mxu0 0
  %1490 = vmatprep.subr.bf16.mxu0 0
  %1491 = vmatpush1.bf16.msra.mxu0 0
  %1492 = vmatprep.subr.bf16.mxu0 0
  %1493 = vmatpush1.bf16.msra.mxu0 0
  %1494 = vmatprep.mubr.bf16.mxu0 0
  %1495 = vmatmul.mubr.bf16.gmra.mrb[0].mxu0 %v969
  %v1496 = vpop.f32.mrb[0].mxu0
  %v1497 = vadd.f32 0.0, %v1496
  %v1498 = vpop.f32.mrb[0].mxu0
  %v1499 = vpop.f32.mrb[0].mxu0
  %v1500 = vadd.f32 0.0, %v1499
  %v1501 = vpop.f32.mrb[0].mxu0
  %1502 = vmatprep.mubr.bf16.mxu0 0
  %1503 = vmatmul.mubr.bf16.gmra.mrb[0].mxu0 %v972
  %v1504 = vpop.f32.mrb[0].mxu0
  %v1505 = vadd.f32 0.0, %v1504
  %v1506 = vpop.f32.mrb[0].mxu0
  %v1507 = vpop.f32.mrb[0].mxu0
  %v1508 = vadd.f32 0.0, %v1507
  %v1509 = vpop.f32.mrb[0].mxu0
  %1510 = vdwg.mxu0
  %1511 = vst.msk [vmem:[#allocation4 + $0xe0] sm:$0xff] %vm1027, %v1497
  %1512 = vst.msk [vmem:[#allocation4 + $0xe8] sm:$0xff] %vm1027, %v1500
  %1513 = vst.msk [vmem:[#allocation4 + $0xf0] sm:$0xff] %vm1027, %v1505
  %1514 = vst.msk [vmem:[#allocation4 + $0xf8] sm:$0xff] %vm1027, %v1508
  %s1515 = scalar_lea.vmem %s6, 96
  %v1516 = vld [vmem:[%s1515] sm:$0xf]
  %v1517 = vld [vmem:[%s1515 + $0x4] sm:$0xf]
  %v1518 = vld [vmem:[%s1515 + $0x8] sm:$0x1]
  %v1522 = vunpack.c.l.b16 %v1516
  %v1523 = vunpack.c.l.b16 %v1517
  %v1524 = vunpack.c.l.b16 %v1518
  %v1525 = vpack.c.b16 %v1523, %v1522
  %v1526 = vpack.c.b16 %v1524, %v1524
  %v1529 = vsel %vm974, %v1526, 0
  %1531 = vmatprep.subr.bf16.mxu0 0
  %1532 = vmatpush1.bf16.msra.mxu0 %v1525
  %1533 = vmatprep.subr.bf16.mxu0 0
  %1534 = vmatpush1.bf16.msra.mxu0 %v1529
  %1535 = vmatprep.subr.bf16.mxu0 0
  %1536 = vmatpush1.bf16.msra.mxu0 0
  %1537 = vmatprep.subr.bf16.mxu0 0
  %1538 = vmatpush1.bf16.msra.mxu0 0
  %1539 = vmatprep.subr.bf16.mxu0 0
  %1540 = vmatpush1.bf16.msra.mxu0 0
  %1541 = vmatprep.subr.bf16.mxu0 0
  %1542 = vmatpush1.bf16.msra.mxu0 0
  %1543 = vmatprep.subr.bf16.mxu0 0
  %1544 = vmatpush1.bf16.msra.mxu0 0
  %1545 = vmatprep.subr.bf16.mxu0 0
  %1546 = vmatpush1.bf16.msra.mxu0 0
  %1547 = vmatprep.subr.bf16.mxu0 0
  %1548 = vmatpush1.bf16.msra.mxu0 0
  %1549 = vmatprep.subr.bf16.mxu0 0
  %1550 = vmatpush1.bf16.msra.mxu0 0
  %1551 = vmatprep.subr.bf16.mxu0 0
  %1552 = vmatpush1.bf16.msra.mxu0 0
  %1553 = vmatprep.subr.bf16.mxu0 0
  %1554 = vmatpush1.bf16.msra.mxu0 0
  %1555 = vmatprep.subr.bf16.mxu0 0
  %1556 = vmatpush1.bf16.msra.mxu0 0
  %1557 = vmatprep.subr.bf16.mxu0 0
  %1558 = vmatpush1.bf16.msra.mxu0 0
  %1559 = vmatprep.subr.bf16.mxu0 0
  %1560 = vmatpush1.bf16.msra.mxu0 0
  %1561 = vmatprep.subr.bf16.mxu0 0
  %1562 = vmatpush1.bf16.msra.mxu0 0
  %1563 = vmatprep.mubr.bf16.mxu0 0
  %1564 = vmatmul.mubr.bf16.gmra.mrb[0].mxu0 %v969
  %v1565 = vpop.f32.mrb[0].mxu0
  %v1566 = vadd.f32 0.0, %v1565
  %v1567 = vpop.f32.mrb[0].mxu0
  %v1568 = vpop.f32.mrb[0].mxu0
  %v1569 = vadd.f32 0.0, %v1568
  %v1570 = vpop.f32.mrb[0].mxu0
  %1571 = vmatprep.mubr.bf16.mxu0 0
  %1572 = vmatmul.mubr.bf16.gmra.mrb[0].mxu0 %v972
  %v1573 = vpop.f32.mrb[0].mxu0
  %v1574 = vadd.f32 0.0, %v1573
  %v1575 = vpop.f32.mrb[0].mxu0
  %v1576 = vpop.f32.mrb[0].mxu0
  %v1577 = vadd.f32 0.0, %v1576
  %v1578 = vpop.f32.mrb[0].mxu0
  %1579 = vdwg.mxu0
  %1580 = vst.msk [vmem:[#allocation4 + $0x100] sm:$0xff] %vm1027, %v1566
  %1581 = vst.msk [vmem:[#allocation4 + $0x108] sm:$0xff] %vm1027, %v1569
  %1582 = vst.msk [vmem:[#allocation4 + $0x110] sm:$0xff] %vm1027, %v1574
  %1583 = vst.msk [vmem:[#allocation4 + $0x118] sm:$0xff] %vm1027, %v1577
  %v1584 = vld [vmem:[#allocation4] sm:$0xff]
  %v1585 = vld [vmem:[#allocation4 + $0x8] sm:$0xff]
  %v1586 = vld [vmem:[#allocation4 + $0x10] sm:$0xff]
  %v1587 = vld [vmem:[#allocation4 + $0x18] sm:$0xff]
  %v1588 = vld [vmem:[#allocation4 + $0x20] sm:$0xff]
  %v1589 = vld [vmem:[#allocation4 + $0x28] sm:$0xff]
  %v1590 = vld [vmem:[#allocation4 + $0x30] sm:$0xff]
  %v1591 = vld [vmem:[#allocation4 + $0x38] sm:$0xff]
  %v1592 = vld [vmem:[#allocation4 + $0x40] sm:$0xff]
  %v1593 = vld [vmem:[#allocation4 + $0x48] sm:$0xff]
  %v1594 = vld [vmem:[#allocation4 + $0x50] sm:$0xff]
  %v1595 = vld [vmem:[#allocation4 + $0x58] sm:$0xff]
  %v1596 = vld [vmem:[#allocation4 + $0x60] sm:$0xff]
  %v1597 = vld [vmem:[#allocation4 + $0x68] sm:$0xff]
  %v1598 = vld [vmem:[#allocation4 + $0x70] sm:$0xff]
  %v1599 = vld [vmem:[#allocation4 + $0x78] sm:$0xff]
  %v1600 = vld [vmem:[#allocation4 + $0x80] sm:$0xff]
  %v1601 = vld [vmem:[#allocation4 + $0x88] sm:$0xff]
  %v1602 = vld [vmem:[#allocation4 + $0x90] sm:$0xff]
  %v1603 = vld [vmem:[#allocation4 + $0x98] sm:$0xff]
  %v1604 = vld [vmem:[#allocation4 + $0xa0] sm:$0xff]
  %v1605 = vld [vmem:[#allocation4 + $0xa8] sm:$0xff]
  %v1606 = vld [vmem:[#allocation4 + $0xb0] sm:$0xff]
  %v1607 = vld [vmem:[#allocation4 + $0xb8] sm:$0xff]
  %v1608 = vld [vmem:[#allocation4 + $0xc0] sm:$0xff]
  %v1609 = vld [vmem:[#allocation4 + $0xc8] sm:$0xff]
  %v1610 = vld [vmem:[#allocation4 + $0xd0] sm:$0xff]
  %v1611 = vld [vmem:[#allocation4 + $0xd8] sm:$0xff]
  %v1612 = vld [vmem:[#allocation4 + $0xe0] sm:$0xff]
  %v1613 = vld [vmem:[#allocation4 + $0xe8] sm:$0xff]
  %v1614 = vld [vmem:[#allocation4 + $0xf0] sm:$0xff]
  %v1615 = vld [vmem:[#allocation4 + $0xf8] sm:$0xff]
  %v1616 = vld [vmem:[#allocation4 + $0x100] sm:$0xff]
  %v1617 = vld [vmem:[#allocation4 + $0x108] sm:$0xff]
  %v1618 = vld [vmem:[#allocation4 + $0x110] sm:$0xff]
  %v1619 = vld [vmem:[#allocation4 + $0x118] sm:$0xff]
  %v1620 = vpack.c.bf16 %v1585, %v1584
  %v1621 = vpack.c.bf16 %v1587, %v1586
  %v1622 = vpack.c.bf16 %v1589, %v1588
  %v1623 = vpack.c.bf16 %v1591, %v1590
  %v1624 = vpack.c.bf16 %v1593, %v1592
  %v1625 = vpack.c.bf16 %v1595, %v1594
  %v1626 = vpack.c.bf16 %v1597, %v1596
  %v1627 = vpack.c.bf16 %v1599, %v1598
  %v1628 = vpack.c.bf16 %v1601, %v1600
  %v1629 = vpack.c.bf16 %v1603, %v1602
  %v1630 = vpack.c.bf16 %v1605, %v1604
  %v1631 = vpack.c.bf16 %v1607, %v1606
  %v1632 = vpack.c.bf16 %v1609, %v1608
  %v1633 = vpack.c.bf16 %v1611, %v1610
  %v1634 = vpack.c.bf16 %v1613, %v1612
  %v1635 = vpack.c.bf16 %v1615, %v1614
  %v1636 = vpack.c.bf16 %v1617, %v1616
  %v1637 = vpack.c.bf16 %v1619, %v1618
  %v1638 = vld [vmem:[%s9 + $0x38] sm:$0xff]
  %v1639 = vld [vmem:[%s9 + $0x40] sm:$0xff]
  %v1640 = vld [vmem:[%s9 + $0x48] sm:$0xff]
  %v1641 = vld [vmem:[%s9 + $0x50] sm:$0xff]
  %1643 = vset.pattern.permute.xlu0 0
  %1644 = vperm.xlu0 %1643, %v1638
  %v1645 = vpop.permute.xlu0 %1644
  %1648 = vset.pattern.permute.xlu0 0
  %1649 = vperm.xlu0 %1648, %v1639
  %v1650 = vpop.permute.xlu0 %1649
  %1653 = vset.pattern.permute.xlu0 0
  %1654 = vperm.xlu0 %1653, %v1640
  %v1655 = vpop.permute.xlu0 %1654
  %1658 = vset.pattern.permute.xlu0 0
  %1659 = vperm.xlu0 %1658, %v1641
  %v1660 = vpop.permute.xlu0 %1659
  %v1670 = vunpack.c.l.b16 %v946
  %v1671 = vunpack.c.h.b16 %v946
  %v1672 = vunpack.c.l.b16 %v947
  %v1673 = vunpack.c.l.b16 %v948
  %v1674 = vunpack.c.h.b16 %v948
  %v1675 = vunpack.c.l.b16 %v949
  %v1676 = vunpack.c.l.b16 %v950
  %v1677 = vunpack.c.h.b16 %v950
  %v1678 = vunpack.c.l.b16 %v951
  %v1679 = vunpack.c.l.b16 %v952
  %v1680 = vunpack.c.h.b16 %v952
  %v1681 = vunpack.c.l.b16 %v953
  %v1682 = vpack.c.b16 %v1673, %v1670
  %v1683 = vpack.c.b16 %v1674, %v1671
  %v1684 = vpack.c.b16 %v1675, %v1672
  %v1685 = vpack.c.b16 %v1679, %v1676
  %v1686 = vpack.c.b16 %v1680, %v1677
  %v1687 = vpack.c.b16 %v1681, %v1678
  %v1693 = vsel %vm203, %v1684, 0
  %v1696 = vsel %vm203, %v1687, 0
  %1698 = vmatprep.subr.bf16.mxu0 0
  %1699 = vmatpush1.bf16.msra.mxu0 %v1620
  %1700 = vmatprep.subr.bf16.mxu0 0
  %1701 = vmatpush1.bf16.msra.mxu0 %v1621
  %1702 = vmatprep.subr.bf16.mxu0 0
  %1703 = vmatpush1.bf16.msra.mxu0 %v1622
  %1704 = vmatprep.subr.bf16.mxu0 0
  %1705 = vmatpush1.bf16.msra.mxu0 %v1623
  %1706 = vmatprep.subr.bf16.mxu0 0
  %1707 = vmatpush1.bf16.msra.mxu0 %v1624
  %1708 = vmatprep.subr.bf16.mxu0 0
  %1709 = vmatpush1.bf16.msra.mxu0 %v1625
  %1710 = vmatprep.subr.bf16.mxu0 0
  %1711 = vmatpush1.bf16.msra.mxu0 %v1626
  %1712 = vmatprep.subr.bf16.mxu0 0
  %1713 = vmatpush1.bf16.msra.mxu0 %v1627
  %1714 = vmatprep.subr.bf16.mxu0 0
  %1715 = vmatpush1.bf16.msra.mxu0 %v1628
  %1716 = vmatprep.subr.bf16.mxu0 0
  %1717 = vmatpush1.bf16.msra.mxu0 %v1629
  %1718 = vmatprep.subr.bf16.mxu0 0
  %1719 = vmatpush1.bf16.msra.mxu0 %v1630
  %1720 = vmatprep.subr.bf16.mxu0 0
  %1721 = vmatpush1.bf16.msra.mxu0 %v1631
  %1722 = vmatprep.subr.bf16.mxu0 0
  %1723 = vmatpush1.bf16.msra.mxu0 %v1632
  %1724 = vmatprep.subr.bf16.mxu0 0
  %1725 = vmatpush1.bf16.msra.mxu0 %v1633
  %1726 = vmatprep.subr.bf16.mxu0 0
  %1727 = vmatpush1.bf16.msra.mxu0 %v1634
  %1728 = vmatprep.subr.bf16.mxu0 0
  %1729 = vmatpush1.bf16.msra.mxu0 %v1635
  %1730 = vmatprep.mubr.bf16.mxu0 %v1683
  %1731 = vmatmul.mubr.bf16.gmra.mrb[0].mxu0 %v1682
  %v1732 = vpop.f32.mrb[0].mxu0
  %v1733 = vadd.f32 %v1645, %v1732
  %v1734 = vpop.f32.mrb[0].mxu0
  %v1735 = vpop.f32.mrb[0].mxu0
  %v1736 = vadd.f32 %v1650, %v1735
  %v1737 = vpop.f32.mrb[0].mxu0
  %1738 = vmatprep.mubr.bf16.mxu0 %v1686
  %1739 = vmatmul.mubr.bf16.gmra.mrb[0].mxu0 %v1685
  %v1740 = vpop.f32.mrb[0].mxu0
  %v1741 = vadd.f32 %v1655, %v1740
  %v1742 = vpop.f32.mrb[0].mxu0
  %v1743 = vpop.f32.mrb[0].mxu0
  %v1744 = vadd.f32 %v1660, %v1743
  %v1745 = vpop.f32.mrb[0].mxu0
  %1746 = vdwg.mxu0
  %1747 = vmatprep.subr.bf16.mxu0 0
  %1748 = vmatpush1.bf16.msra.mxu0 %v1636
  %1749 = vmatprep.subr.bf16.mxu0 0
  %1750 = vmatpush1.bf16.msra.mxu0 %v1637
  %1751 = vmatprep.subr.bf16.mxu0 0
  %1752 = vmatpush1.bf16.msra.mxu0 0
  %1753 = vmatprep.subr.bf16.mxu0 0
  %1754 = vmatpush1.bf16.msra.mxu0 0
  %1755 = vmatprep.subr.bf16.mxu0 0
  %1756 = vmatpush1.bf16.msra.mxu0 0
  %1757 = vmatprep.subr.bf16.mxu0 0
  %1758 = vmatpush1.bf16.msra.mxu0 0
  %1759 = vmatprep.subr.bf16.mxu0 0
  %1760 = vmatpush1.bf16.msra.mxu0 0
  %1761 = vmatprep.subr.bf16.mxu0 0
  %1762 = vmatpush1.bf16.msra.mxu0 0
  %1763 = vmatprep.subr.bf16.mxu0 0
  %1764 = vmatpush1.bf16.msra.mxu0 0
  %1765 = vmatprep.subr.bf16.mxu0 0
  %1766 = vmatpush1.bf16.msra.mxu0 0
  %1767 = vmatprep.subr.bf16.mxu0 0
  %1768 = vmatpush1.bf16.msra.mxu0 0
  %1769 = vmatprep.subr.bf16.mxu0 0
  %1770 = vmatpush1.bf16.msra.mxu0 0
  %1771 = vmatprep.subr.bf16.mxu0 0
  %1772 = vmatpush1.bf16.msra.mxu0 0
  %1773 = vmatprep.subr.bf16.mxu0 0
  %1774 = vmatpush1.bf16.msra.mxu0 0
  %1775 = vmatprep.subr.bf16.mxu0 0
  %1776 = vmatpush1.bf16.msra.mxu0 0
  %1777 = vmatprep.subr.bf16.mxu0 0
  %1778 = vmatpush1.bf16.msra.mxu0 0
  %1779 = vmatprep.mubr.bf16.mxu0 0
  %1780 = vmatmul.mubr.bf16.gmra.mrb[0].mxu0 %v1693
  %v1781 = vpop.f32.mrb[0].mxu0
  %v1782 = vadd.f32 %v1733, %v1781
  %v1783 = vpop.f32.mrb[0].mxu0
  %v1784 = vpop.f32.mrb[0].mxu0
  %v1785 = vadd.f32 %v1736, %v1784
  %v1786 = vpop.f32.mrb[0].mxu0
  %1787 = vmatprep.mubr.bf16.mxu0 0
  %1788 = vmatmul.mubr.bf16.gmra.mrb[0].mxu0 %v1696
  %v1789 = vpop.f32.mrb[0].mxu0
  %v1790 = vadd.f32 %v1741, %v1789
  %v1791 = vpop.f32.mrb[0].mxu0
  %v1792 = vpop.f32.mrb[0].mxu0
  %v1793 = vadd.f32 %v1744, %v1792
  %v1794 = vpop.f32.mrb[0].mxu0
  %1795 = vdwg.mxu0
  %v1796 = vmax.f32 %v1782, 0.0
  %v1797 = vmax.f32 %v1785, 0.0
  %v1798 = vmax.f32 %v1790, 0.0
  %v1799 = vmax.f32 %v1793, 0.0
  %v1800 = vld [vmem:[%s8] sm:$0x3]
  %v1801 = vpack.c.bf16 %v1797, %v1796
  %v1802 = vpack.c.bf16 %v1799, %v1798
  %v1803 = vld [vmem:[%s9 + $0x58] sm:$0xf]
  %1805 = vset.pattern.permute.xlu0 0
  %1806 = vperm.xlu0 %1805, %v1803
  %v1807 = vpop.permute.xlu0 %1806
  %v1810 = vsel %vm203, %v1800, 0
  %1812 = vmatprep.subr.bf16.mxu0 0
  %1813 = vmatpush1.bf16.msra.mxu0 %v1801
  %1814 = vmatprep.subr.bf16.mxu0 0
  %1815 = vmatpush1.bf16.msra.mxu0 %v1802
  %1816 = vmatprep.subr.bf16.mxu0 0
  %1817 = vmatpush1.bf16.msra.mxu0 0
  %1818 = vmatprep.subr.bf16.mxu0 0
  %1819 = vmatpush1.bf16.msra.mxu0 0
  %1820 = vmatprep.subr.bf16.mxu0 0
  %1821 = vmatpush1.bf16.msra.mxu0 0
  %1822 = vmatprep.subr.bf16.mxu0 0
  %1823 = vmatpush1.bf16.msra.mxu0 0
  %1824 = vmatprep.subr.bf16.mxu0 0
  %1825 = vmatpush1.bf16.msra.mxu0 0
  %1826 = vmatprep.subr.bf16.mxu0 0
  %1827 = vmatpush1.bf16.msra.mxu0 0
  %1828 = vmatprep.subr.bf16.mxu0 0
  %1829 = vmatpush1.bf16.msra.mxu0 0
  %1830 = vmatprep.subr.bf16.mxu0 0
  %1831 = vmatpush1.bf16.msra.mxu0 0
  %1832 = vmatprep.subr.bf16.mxu0 0
  %1833 = vmatpush1.bf16.msra.mxu0 0
  %1834 = vmatprep.subr.bf16.mxu0 0
  %1835 = vmatpush1.bf16.msra.mxu0 0
  %1836 = vmatprep.subr.bf16.mxu0 0
  %1837 = vmatpush1.bf16.msra.mxu0 0
  %1838 = vmatprep.subr.bf16.mxu0 0
  %1839 = vmatpush1.bf16.msra.mxu0 0
  %1840 = vmatprep.subr.bf16.mxu0 0
  %1841 = vmatpush1.bf16.msra.mxu0 0
  %1842 = vmatprep.subr.bf16.mxu0 0
  %1843 = vmatpush1.bf16.msra.mxu0 0
  %1844 = vmatprep.mubr.bf16.mxu0 0
  %1845 = vmatmul.mubr.bf16.gmra.mrb[0].mxu0 %v1810
  %v1846 = vpop.f32.mrb[0].mxu0
  %v1847 = vadd.f32 %v1807, %v1846
  %v1848 = vpop.f32.mrb[0].mxu0
  %v1849 = vpop.f32.mrb[0].mxu0
  %v1850 = vpop.f32.mrb[0].mxu0
  %1851 = vdwg.mxu0
  %vm1852 = vcmask 11264
  %1853 = vst.msk [vmem:[%s10] sm:$0xf] %vm1852, %v1847
  // Predicated region
  $region42: #{dqn_cnn_forward.1} parent=0 // pred_check
    _
  $region43: #{dqn_cnn_forward.1} parent=0 // pred_check_branch
    %1855 = sbr.rel (0) target = $region45
  $region44: #{dqn_cnn_forward.1} parent=0 // pred_region
    _
  $region45: #{dqn_cnn_forward.1} parent=0 // pred_fallthru
    _
  // Predicated region
  $region46: #{dqn_cnn_forward.1} parent=0 // pred_check
    _
  $region47: #{dqn_cnn_forward.1} parent=0 // pred_check_branch
    %1857 = sbr.rel (0) target = $region49
  $region48: #{dqn_cnn_forward.1} parent=0 // pred_region
    _
  $region49: #{dqn_cnn_forward.1} parent=0 // pred_fallthru
    _

</llo_original>
